<compile_context>
chip_gen: v5e
topology: v5e:2x2
jax: 0.10.0
libtpu: 0.0.40
codegen_flags: <defaults>
</compile_context>

<pallas_src>
import functools

import jax
import jax.numpy as jnp
from jax.experimental import pallas as pl
from jax.experimental.pallas import tpu as pltpu


def _vmem():
    return pl.BlockSpec(memory_space=pltpu.MemorySpace.VMEM)


# ----------------------------- fused whole-model kernel -----------------------------

def _model_kernel(x_ref, emb_wt_ref, emb_b_ref,
                  cosq_ref, sinq_ref, cosk_ref, sink_ref,
                  attn_norm_ref, wqkv_ref, wo_ref,
                  ffn_norm_ref, w13_ref, w2_ref,
                  final_norm_ref, out_wt_ref, out_b_ref,
                  o_ref, *, n_layers, B, T, H, KV, hd, hidden, scale, eps):
    rep = H // KV
    Q = H * hd
    Kc = KV * hd

    def rms(v, w):
        ms = jnp.mean(v * v, axis=-1, keepdims=True)
        return v * jax.lax.rsqrt(ms + eps) * w

    x = x_ref[...].astype(jnp.float32)
    h = jnp.dot(x, emb_wt_ref[...], preferred_element_type=jnp.float32) + emb_b_ref[...]
    # TODO(synk): `self.pos_encoder` is called in forward but never defined in __init__;
    # treated as identity.

    cos_q = cosq_ref[...]
    sin_q = sinq_ref[...]
    cos_k = cosk_ref[...]
    sin_k = sink_ref[...]

    for l in range(n_layers):
        x_in = h
        hn = rms(x_in, attn_norm_ref[l])

        # Fused QKV GEMM.  Columns: [Wq | Wq_pairswapped | Wk | Wk_pairswapped | Wv],
        # so RoPE (complex pair rotation) is pure elementwise math on the GEMM output.
        qkv = jnp.dot(hn, wqkv_ref[l], preferred_element_type=jnp.float32)
        q = qkv[:, 0:Q] * cos_q + qkv[:, Q:2 * Q] * sin_q
        k = (qkv[:, 2 * Q:2 * Q + Kc] * cos_k
             + qkv[:, 2 * Q + Kc:2 * Q + 2 * Kc] * sin_k)
        v = qkv[:, 2 * Q + 2 * Kc:2 * Q + 3 * Kc]

        # Attention per (batch, head); GQA by indexing the KV-head group
        # (torch.repeat_interleave semantics: query head hh -> kv head hh // rep).
        rows = []
        for b in range(B):
            r0 = b * T
            heads = []
            for hh in range(H):
                g = hh // rep
                qb = q[r0:r0 + T, hh * hd:(hh + 1) * hd]
                kb = k[r0:r0 + T, g * hd:(g + 1) * hd]
                vb = v[r0:r0 + T, g * hd:(g + 1) * hd]
                s = jax.lax.dot_general(
                    qb, kb, (((1,), (1,)), ((), ())),
                    preferred_element_type=jnp.float32) * scale
                s = s - jnp.max(s, axis=-1, keepdims=True)
                p = jnp.exp(s)
                p = p * pl.reciprocal(jnp.sum(p, axis=-1, keepdims=True), approx=True)
                heads.append(jnp.dot(p, vb, preferred_element_type=jnp.float32))
            rows.append(jnp.concatenate(heads, axis=1))
        attn = jnp.concatenate(rows, axis=0)                     # (B*T, H*hd)
        h = x_in + jnp.dot(attn, wo_ref[l], preferred_element_type=jnp.float32)

        # SwiGLU FFN: fused [w1 | w3] GEMM (lane-dense 2*hidden output), then w2.
        fn = rms(h, ffn_norm_ref[l])
        h13 = jnp.dot(fn, w13_ref[l], preferred_element_type=jnp.float32)
        h1 = h13[:, :hidden]
        h3 = h13[:, hidden:]
        g13 = (h1 * jax.nn.sigmoid(h1)) * h3
        h = h + jnp.dot(g13, w2_ref[l], preferred_element_type=jnp.float32)

    hn = rms(h, final_norm_ref[...])
    # mean over T per batch == x.mean(dim=1)
    pooled = jnp.concatenate(
        [jnp.mean(hn[b * T:(b + 1) * T, :], axis=0, keepdims=True) for b in range(B)],
        axis=0)                                                  # (B, dim)
    o_ref[...] = (jnp.dot(pooled, out_wt_ref[...], preferred_element_type=jnp.float32)
                  + out_b_ref[...]).astype(o_ref.dtype)


# ----------------------------- host-side weight packing -----------------------------

def _prepare(params, args, B, T):
    H, KV, hd = args["n_heads"], args["n_kv_heads"], args["head_dim"]
    C = args["num_classes"]
    theta = args["rope_theta"]

    # RoPE tables expanded to the flattened (B*T, n_heads*hd) layout.
    # rows are ordered b*T + t; within a head, features are adjacent (x0, x1) pairs.
    freqs = 1.0 / (theta ** (jnp.arange(0, hd, 2, dtype=jnp.float32) / hd))
    t = jnp.arange(T, dtype=jnp.float32)
    ang = jnp.outer(t, freqs)                               # (T, hd//2)
    cos = jnp.repeat(jnp.cos(ang), 2, axis=1)               # (T, hd)
    sin = jnp.repeat(jnp.sin(ang), 2, axis=1)
    sign = jnp.tile(jnp.array([-1.0, 1.0], jnp.float32), hd // 2)
    sin = sin * sign                                        # -sin at even, +sin at odd
    cos_q = jnp.tile(cos, (B, H))
    sin_q = jnp.tile(sin, (B, H))
    cos_k = jnp.tile(cos, (B, KV))
    sin_k = jnp.tile(sin, (B, KV))

    def swap_pair_cols(wt):  # swap adjacent output columns (RoPE pair swap folded into W)
        i, o = wt.shape
        return wt.reshape(i, o // 2, 2)[:, :, ::-1].reshape(i, o)

    wqkv, wo, w13, w2, anorm, fnorm = [], [], [], [], [], []
    for lp in params["layers"]:
        wq_t, wk_t, wv_t = lp["wq"].T, lp["wk"].T, lp["wv"].T
        wqkv.append(jnp.concatenate(
            [wq_t, swap_pair_cols(wq_t), wk_t, swap_pair_cols(wk_t), wv_t], axis=1))
        wo.append(lp["wo"].T)
        w13.append(jnp.concatenate([lp["w1"].T, lp["w3"].T], axis=1))
        w2.append(lp["w2"].T)
        anorm.append(lp["attn_norm"].reshape(1, -1))
        fnorm.append(lp["ffn_norm"].reshape(1, -1))

    c_pad = ((C + 127) // 128) * 128
    out_wt = jnp.pad(params["out_w"].T, ((0, 0), (0, c_pad - C)))
    out_b = jnp.pad(params["out_b"], (0, c_pad - C)).reshape(1, -1)

    return dict(
        emb_wt=params["emb_w"].T, emb_b=params["emb_b"].reshape(1, -1),
        cos_q=cos_q, sin_q=sin_q, cos_k=cos_k, sin_k=sin_k,
        attn_norm=jnp.stack(anorm), wqkv=jnp.stack(wqkv), wo=jnp.stack(wo),
        ffn_norm=jnp.stack(fnorm), w13=jnp.stack(w13), w2=jnp.stack(w2),
        final_norm=params["norm_w"].reshape(1, -1),
        out_wt=out_wt, out_b=out_b, c_pad=c_pad)


def asl_vision_transformer(params, x, seqlens, args):
    """x: (B, T, input_dim).  seqlens is unused on the no-cache path (sliding_window=None)."""
    del seqlens  # TODO(synk): seqlens only matters for the RotatingBufferCache path; here mask=None.
    B, T, _ = x.shape
    H, KV, hd = args["n_heads"], args["n_kv_heads"], args["head_dim"]
    prep = _prepare(params, args, B, T)

    kernel = functools.partial(
        _model_kernel, n_layers=args["n_layers"], B=B, T=T, H=H, KV=KV, hd=hd,
        hidden=args["hidden_dim"], scale=hd ** -0.5, eps=args["norm_eps"])

    out = pl.pallas_call(
        kernel,
        out_shape=jax.ShapeDtypeStruct((B, prep["c_pad"]), jnp.float32),
        in_specs=[_vmem()] * 16,
        out_specs=_vmem(),
    )(x.reshape(B * T, -1).astype(jnp.float32),
      prep["emb_wt"], prep["emb_b"],
      prep["cos_q"], prep["sin_q"], prep["cos_k"], prep["sin_k"],
      prep["attn_norm"], prep["wqkv"], prep["wo"],
      prep["ffn_norm"], prep["w13"], prep["w2"],
      prep["final_norm"], prep["out_wt"], prep["out_b"])

    return out[:, :args["num_classes"]]


# ----------------------------- params (PyTorch-style layouts) -----------------------------

def init_params(key, args):
    dim = args["dim"]
    H, KV, hd = args["n_heads"], args["n_kv_heads"], args["head_dim"]
    hidden = args["hidden_dim"]

    keys = iter(jax.random.split(key, 8 + 8 * args["n_layers"]))

    def w(shape, scale=0.05):
        return scale * jax.random.normal(next(keys), shape, jnp.float32)

    params = {
        "emb_w": w((dim, args["input_dim"])),
        "emb_b": w((dim,)),
        "norm_w": jnp.ones((dim,), jnp.float32),
        "out_w": w((args["num_classes"], dim)),
        "out_b": w((args["num_classes"],)),
        "layers": [],
    }
    for _ in range(args["n_layers"]):
        params["layers"].append(
            {
                "attn_norm": jnp.ones((dim,), jnp.float32),
                "ffn_norm": jnp.ones((dim,), jnp.float32),
                "wq": w((H * hd, dim)),
                "wk": w((KV * hd, dim)),
                "wv": w((KV * hd, dim)),
                "wo": w((dim, H * hd)),
                "w1": w((hidden, dim)),
                "w2": w((dim, hidden)),
                "w3": w((hidden, dim)),
            }
        )
    return params


if __name__ == "__main__":
    args = dict(
        dim=32,
        n_layers=2,
        head_dim=8,
        hidden_dim=64,
        n_heads=4,
        n_kv_heads=2,
        norm_eps=1e-5,
        input_dim=16,
        num_classes=10,
        rope_theta=1_000_000.0,  # sliding_window is None -> theta = 1e6
    )
    B, T = 2, 8

    key = jax.random.PRNGKey(0)
    k_params, k_x = jax.random.split(key)
    params = init_params(k_params, args)
    x = jax.random.normal(k_x, (B, T, args["input_dim"]), jnp.float32)
    seqlens = [T] * B  # only relevant for the cache path (sliding_window), unused here

    out = asl_vision_transformer(params, x, seqlens, args)
    out = jax.block_until_ready(out)
    assert out.shape == (B, args["num_classes"]), out.shape
    assert bool(jnp.all(jnp.isfinite(out)))
    print("KERNEL_OK")
</pallas_src>

<mosaic_0001>
module attributes {stable_mosaic.version = 11 : i64} {
  func.func @_model_kernel(%arg0: memref<16x16xf32, #tpu.memory_space<vmem>>, %arg1: memref<16x32xf32, #tpu.memory_space<vmem>>, %arg2: memref<1x32xf32, #tpu.memory_space<vmem>>, %arg3: memref<16x32xf32, #tpu.memory_space<vmem>>, %arg4: memref<16x32xf32, #tpu.memory_space<vmem>>, %arg5: memref<16x16xf32, #tpu.memory_space<vmem>>, %arg6: memref<16x16xf32, #tpu.memory_space<vmem>>, %arg7: memref<2x1x32xf32, #tpu.memory_space<vmem>>, %arg8: memref<2x32x112xf32, #tpu.memory_space<vmem>>, %arg9: memref<2x32x32xf32, #tpu.memory_space<vmem>>, %arg10: memref<2x1x32xf32, #tpu.memory_space<vmem>>, %arg11: memref<2x32x128xf32, #tpu.memory_space<vmem>>, %arg12: memref<2x64x32xf32, #tpu.memory_space<vmem>>, %arg13: memref<1x32xf32, #tpu.memory_space<vmem>>, %arg14: memref<32x128xf32, #tpu.memory_space<vmem>>, %arg15: memref<1x128xf32, #tpu.memory_space<vmem>>, %arg16: memref<2x128xf32, #tpu.memory_space<vmem>>) attributes {dimension_semantics = [], scalar_prefetch = 0 : i64, scratch_operands = 0 : i64, tpu.core_type = #tpu.core_type<tc>} {
    %c0 = arith.constant 0 : index
    %c0_0 = arith.constant 0 : index
    %0 = vector.load %arg0[%c0, %c0_0] : memref<16x16xf32, #tpu.memory_space<vmem>>, vector<16x16xf32>
    %c0_1 = arith.constant 0 : index
    %c0_2 = arith.constant 0 : index
    %1 = vector.load %arg1[%c0_1, %c0_2] : memref<16x32xf32, #tpu.memory_space<vmem>>, vector<16x32xf32>
    %cst = arith.constant dense<0.000000e+00> : vector<16x32xf32>
    %2 = tpu.matmul %0, %1, %cst {dimension_numbers = #tpu.dot_dimension_numbers<[1], [0], [0], [1], [0, 0, 1, 1], [], []>} : vector<16x16xf32>, vector<16x32xf32>, vector<16x32xf32> -> vector<16x32xf32>
    %c0_3 = arith.constant 0 : index
    %c0_4 = arith.constant 0 : index
    %3 = vector.load %arg2[%c0_3, %c0_4] : memref<1x32xf32, #tpu.memory_space<vmem>>, vector<1x32xf32>
    %4 = vector.broadcast %3 : vector<1x32xf32> to vector<16x32xf32>
    %5 = arith.addf %2, %4 : vector<16x32xf32>
    %c0_5 = arith.constant 0 : index
    %c0_6 = arith.constant 0 : index
    %6 = vector.load %arg3[%c0_5, %c0_6] : memref<16x32xf32, #tpu.memory_space<vmem>>, vector<16x32xf32>
    %c0_7 = arith.constant 0 : index
    %c0_8 = arith.constant 0 : index
    %7 = vector.load %arg4[%c0_7, %c0_8] : memref<16x32xf32, #tpu.memory_space<vmem>>, vector<16x32xf32>
    %c0_9 = arith.constant 0 : index
    %c0_10 = arith.constant 0 : index
    %8 = vector.load %arg5[%c0_9, %c0_10] : memref<16x16xf32, #tpu.memory_space<vmem>>, vector<16x16xf32>
    %c0_11 = arith.constant 0 : index
    %c0_12 = arith.constant 0 : index
    %9 = vector.load %arg6[%c0_11, %c0_12] : memref<16x16xf32, #tpu.memory_space<vmem>>, vector<16x16xf32>
    %c0_13 = arith.constant 0 : index
    %c0_14 = arith.constant 0 : index
    %c0_15 = arith.constant 0 : index
    %10 = vector.load %arg7[%c0_13, %c0_14, %c0_15] : memref<2x1x32xf32, #tpu.memory_space<vmem>>, vector<1x1x32xf32>
    %11 = vector.shape_cast %10 : vector<1x1x32xf32> to vector<1x32xf32>
    %12 = arith.mulf %5, %5 : vector<16x32xf32>
    %cst_16 = arith.constant dense<0.000000e+00> : vector<16xf32>
    %13 = vector.multi_reduction <add>, %12, %cst_16 [1] : vector<16x32xf32> to vector<16xf32>
    %14 = vector.shape_cast %13 : vector<16xf32> to vector<16x1xf32>
    %cst_17 = arith.constant 3.200000e+01 : f32
    %15 = vector.broadcast %cst_17 : f32 to vector<16x1xf32>
    %16 = arith.divf %14, %15 : vector<16x1xf32>
    %cst_18 = arith.constant 9.99999974E-6 : f32
    %17 = vector.broadcast %cst_18 : f32 to vector<16x1xf32>
    %18 = arith.addf %16, %17 : vector<16x1xf32>
    %19 = math.rsqrt %18 : vector<16x1xf32>
    %20 = vector.broadcast %19 : vector<16x1xf32> to vector<16x32xf32>
    %21 = arith.mulf %5, %20 : vector<16x32xf32>
    %22 = vector.broadcast %11 : vector<1x32xf32> to vector<16x32xf32>
    %23 = arith.mulf %21, %22 : vector<16x32xf32>
    %c0_19 = arith.constant 0 : index
    %c0_20 = arith.constant 0 : index
    %c0_21 = arith.constant 0 : index
    %24 = vector.load %arg8[%c0_19, %c0_20, %c0_21] : memref<2x32x112xf32, #tpu.memory_space<vmem>>, vector<1x32x112xf32>
    %25 = vector.shape_cast %24 : vector<1x32x112xf32> to vector<32x112xf32>
    %cst_22 = arith.constant dense<0.000000e+00> : vector<16x112xf32>
    %26 = tpu.matmul %23, %25, %cst_22 {dimension_numbers = #tpu.dot_dimension_numbers<[1], [0], [0], [1], [0, 0, 1, 1], [], []>} : vector<16x32xf32>, vector<32x112xf32>, vector<16x112xf32> -> vector<16x112xf32>
    %27 = vector.extract_strided_slice %26 {offsets = [0, 0], sizes = [16, 32], strides = [1, 1]} : vector<16x112xf32> to vector<16x32xf32>
    %28 = arith.mulf %27, %6 : vector<16x32xf32>
    %29 = vector.extract_strided_slice %26 {offsets = [0, 32], sizes = [16, 32], strides = [1, 1]} : vector<16x112xf32> to vector<16x32xf32>
    %30 = arith.mulf %29, %7 : vector<16x32xf32>
    %31 = arith.addf %28, %30 : vector<16x32xf32>
    %32 = vector.extract_strided_slice %26 {offsets = [0, 64], sizes = [16, 16], strides = [1, 1]} : vector<16x112xf32> to vector<16x16xf32>
    %33 = arith.mulf %32, %8 : vector<16x16xf32>
    %34 = vector.extract_strided_slice %26 {offsets = [0, 80], sizes = [16, 16], strides = [1, 1]} : vector<16x112xf32> to vector<16x16xf32>
    %35 = arith.mulf %34, %9 : vector<16x16xf32>
    %36 = arith.addf %33, %35 : vector<16x16xf32>
    %37 = vector.extract_strided_slice %26 {offsets = [0, 96], sizes = [16, 16], strides = [1, 1]} : vector<16x112xf32> to vector<16x16xf32>
    %38 = vector.extract_strided_slice %31 {offsets = [0, 0], sizes = [8, 8], strides = [1, 1]} : vector<16x32xf32> to vector<8x8xf32>
    %39 = vector.extract_strided_slice %36 {offsets = [0, 0], sizes = [8, 8], strides = [1, 1]} : vector<16x16xf32> to vector<8x8xf32>
    %40 = vector.extract_strided_slice %37 {offsets = [0, 0], sizes = [8, 8], strides = [1, 1]} : vector<16x16xf32> to vector<8x8xf32>
    %cst_23 = arith.constant dense<0.000000e+00> : vector<8x8xf32>
    %41 = tpu.matmul %38, %39, %cst_23 {dimension_numbers = #tpu.dot_dimension_numbers<[1], [1], [0], [0], [0, 0, 1, 0], [], []>} : vector<8x8xf32>, vector<8x8xf32>, vector<8x8xf32> -> vector<8x8xf32>
    %cst_24 = arith.constant 0.353553385 : f32
    %42 = vector.broadcast %cst_24 : f32 to vector<8x8xf32>
    %43 = arith.mulf %41, %42 : vector<8x8xf32>
    %cst_25 = arith.constant dense<0xFF800000> : vector<8xf32>
    %44 = vector.multi_reduction <maximumf>, %43, %cst_25 [1] : vector<8x8xf32> to vector<8xf32>
    %45 = vector.shape_cast %44 : vector<8xf32> to vector<8x1xf32>
    %46 = vector.broadcast %45 : vector<8x1xf32> to vector<8x8xf32>
    %47 = arith.subf %43, %46 : vector<8x8xf32>
    %48 = math.exp %47 : vector<8x8xf32>
    %cst_26 = arith.constant dense<0.000000e+00> : vector<8xf32>
    %49 = vector.multi_reduction <add>, %48, %cst_26 [1] : vector<8x8xf32> to vector<8xf32>
    %50 = vector.shape_cast %49 : vector<8xf32> to vector<8x1xf32>
    %51 = tpu.reciprocal %50 {approx = true} : vector<8x1xf32> -> vector<8x1xf32>
    %52 = vector.broadcast %51 : vector<8x1xf32> to vector<8x8xf32>
    %53 = arith.mulf %48, %52 : vector<8x8xf32>
    %cst_27 = arith.constant dense<0.000000e+00> : vector<8x8xf32>
    %54 = tpu.matmul %53, %40, %cst_27 {dimension_numbers = #tpu.dot_dimension_numbers<[1], [0], [0], [1], [0, 0, 1, 1], [], []>} : vector<8x8xf32>, vector<8x8xf32>, vector<8x8xf32> -> vector<8x8xf32>
    %55 = vector.extract_strided_slice %31 {offsets = [0, 8], sizes = [8, 8], strides = [1, 1]} : vector<16x32xf32> to vector<8x8xf32>
    %56 = vector.extract_strided_slice %36 {offsets = [0, 0], sizes = [8, 8], strides = [1, 1]} : vector<16x16xf32> to vector<8x8xf32>
    %57 = vector.extract_strided_slice %37 {offsets = [0, 0], sizes = [8, 8], strides = [1, 1]} : vector<16x16xf32> to vector<8x8xf32>
    %cst_28 = arith.constant dense<0.000000e+00> : vector<8x8xf32>
    %58 = tpu.matmul %55, %56, %cst_28 {dimension_numbers = #tpu.dot_dimension_numbers<[1], [1], [0], [0], [0, 0, 1, 0], [], []>} : vector<8x8xf32>, vector<8x8xf32>, vector<8x8xf32> -> vector<8x8xf32>
    %cst_29 = arith.constant 0.353553385 : f32
    %59 = vector.broadcast %cst_29 : f32 to vector<8x8xf32>
    %60 = arith.mulf %58, %59 : vector<8x8xf32>
    %cst_30 = arith.constant dense<0xFF800000> : vector<8xf32>
    %61 = vector.multi_reduction <maximumf>, %60, %cst_30 [1] : vector<8x8xf32> to vector<8xf32>
    %62 = vector.shape_cast %61 : vector<8xf32> to vector<8x1xf32>
    %63 = vector.broadcast %62 : vector<8x1xf32> to vector<8x8xf32>
    %64 = arith.subf %60, %63 : vector<8x8xf32>
    %65 = math.exp %64 : vector<8x8xf32>
    %cst_31 = arith.constant dense<0.000000e+00> : vector<8xf32>
    %66 = vector.multi_reduction <add>, %65, %cst_31 [1] : vector<8x8xf32> to vector<8xf32>
    %67 = vector.shape_cast %66 : vector<8xf32> to vector<8x1xf32>
    %68 = tpu.reciprocal %67 {approx = true} : vector<8x1xf32> -> vector<8x1xf32>
    %69 = vector.broadcast %68 : vector<8x1xf32> to vector<8x8xf32>
    %70 = arith.mulf %65, %69 : vector<8x8xf32>
    %cst_32 = arith.constant dense<0.000000e+00> : vector<8x8xf32>
    %71 = tpu.matmul %70, %57, %cst_32 {dimension_numbers = #tpu.dot_dimension_numbers<[1], [0], [0], [1], [0, 0, 1, 1], [], []>} : vector<8x8xf32>, vector<8x8xf32>, vector<8x8xf32> -> vector<8x8xf32>
    %72 = vector.extract_strided_slice %31 {offsets = [0, 16], sizes = [8, 8], strides = [1, 1]} : vector<16x32xf32> to vector<8x8xf32>
    %73 = vector.extract_strided_slice %36 {offsets = [0, 8], sizes = [8, 8], strides = [1, 1]} : vector<16x16xf32> to vector<8x8xf32>
    %74 = vector.extract_strided_slice %37 {offsets = [0, 8], sizes = [8, 8], strides = [1, 1]} : vector<16x16xf32> to vector<8x8xf32>
    %cst_33 = arith.constant dense<0.000000e+00> : vector<8x8xf32>
    %75 = tpu.matmul %72, %73, %cst_33 {dimension_numbers = #tpu.dot_dimension_numbers<[1], [1], [0], [0], [0, 0, 1, 0], [], []>} : vector<8x8xf32>, vector<8x8xf32>, vector<8x8xf32> -> vector<8x8xf32>
    %cst_34 = arith.constant 0.353553385 : f32
    %76 = vector.broadcast %cst_34 : f32 to vector<8x8xf32>
    %77 = arith.mulf %75, %76 : vector<8x8xf32>
    %cst_35 = arith.constant dense<0xFF800000> : vector<8xf32>
    %78 = vector.multi_reduction <maximumf>, %77, %cst_35 [1] : vector<8x8xf32> to vector<8xf32>
    %79 = vector.shape_cast %78 : vector<8xf32> to vector<8x1xf32>
    %80 = vector.broadcast %79 : vector<8x1xf32> to vector<8x8xf32>
    %81 = arith.subf %77, %80 : vector<8x8xf32>
    %82 = math.exp %81 : vector<8x8xf32>
    %cst_36 = arith.constant dense<0.000000e+00> : vector<8xf32>
    %83 = vector.multi_reduction <add>, %82, %cst_36 [1] : vector<8x8xf32> to vector<8xf32>
    %84 = vector.shape_cast %83 : vector<8xf32> to vector<8x1xf32>
    %85 = tpu.reciprocal %84 {approx = true} : vector<8x1xf32> -> vector<8x1xf32>
    %86 = vector.broadcast %85 : vector<8x1xf32> to vector<8x8xf32>
    %87 = arith.mulf %82, %86 : vector<8x8xf32>
    %cst_37 = arith.constant dense<0.000000e+00> : vector<8x8xf32>
    %88 = tpu.matmul %87, %74, %cst_37 {dimension_numbers = #tpu.dot_dimension_numbers<[1], [0], [0], [1], [0, 0, 1, 1], [], []>} : vector<8x8xf32>, vector<8x8xf32>, vector<8x8xf32> -> vector<8x8xf32>
    %89 = vector.extract_strided_slice %31 {offsets = [0, 24], sizes = [8, 8], strides = [1, 1]} : vector<16x32xf32> to vector<8x8xf32>
    %90 = vector.extract_strided_slice %36 {offsets = [0, 8], sizes = [8, 8], strides = [1, 1]} : vector<16x16xf32> to vector<8x8xf32>
    %91 = vector.extract_strided_slice %37 {offsets = [0, 8], sizes = [8, 8], strides = [1, 1]} : vector<16x16xf32> to vector<8x8xf32>
    %cst_38 = arith.constant dense<0.000000e+00> : vector<8x8xf32>
    %92 = tpu.matmul %89, %90, %cst_38 {dimension_numbers = #tpu.dot_dimension_numbers<[1], [1], [0], [0], [0, 0, 1, 0], [], []>} : vector<8x8xf32>, vector<8x8xf32>, vector<8x8xf32> -> vector<8x8xf32>
    %cst_39 = arith.constant 0.353553385 : f32
    %93 = vector.broadcast %cst_39 : f32 to vector<8x8xf32>
    %94 = arith.mulf %92, %93 : vector<8x8xf32>
    %cst_40 = arith.constant dense<0xFF800000> : vector<8xf32>
    %95 = vector.multi_reduction <maximumf>, %94, %cst_40 [1] : vector<8x8xf32> to vector<8xf32>
    %96 = vector.shape_cast %95 : vector<8xf32> to vector<8x1xf32>
    %97 = vector.broadcast %96 : vector<8x1xf32> to vector<8x8xf32>
    %98 = arith.subf %94, %97 : vector<8x8xf32>
    %99 = math.exp %98 : vector<8x8xf32>
    %cst_41 = arith.constant dense<0.000000e+00> : vector<8xf32>
    %100 = vector.multi_reduction <add>, %99, %cst_41 [1] : vector<8x8xf32> to vector<8xf32>
    %101 = vector.shape_cast %100 : vector<8xf32> to vector<8x1xf32>
    %102 = tpu.reciprocal %101 {approx = true} : vector<8x1xf32> -> vector<8x1xf32>
    %103 = vector.broadcast %102 : vector<8x1xf32> to vector<8x8xf32>
    %104 = arith.mulf %99, %103 : vector<8x8xf32>
    %cst_42 = arith.constant dense<0.000000e+00> : vector<8x8xf32>
    %105 = tpu.matmul %104, %91, %cst_42 {dimension_numbers = #tpu.dot_dimension_numbers<[1], [0], [0], [1], [0, 0, 1, 1], [], []>} : vector<8x8xf32>, vector<8x8xf32>, vector<8x8xf32> -> vector<8x8xf32>
    %106 = tpu.concatenate %54, %71, %88, %105 in 1 : vector<8x8xf32>, vector<8x8xf32>, vector<8x8xf32>, vector<8x8xf32> -> vector<8x32xf32>
    %107 = vector.extract_strided_slice %31 {offsets = [8, 0], sizes = [8, 8], strides = [1, 1]} : vector<16x32xf32> to vector<8x8xf32>
    %108 = vector.extract_strided_slice %36 {offsets = [8, 0], sizes = [8, 8], strides = [1, 1]} : vector<16x16xf32> to vector<8x8xf32>
    %109 = vector.extract_strided_slice %37 {offsets = [8, 0], sizes = [8, 8], strides = [1, 1]} : vector<16x16xf32> to vector<8x8xf32>
    %cst_43 = arith.constant dense<0.000000e+00> : vector<8x8xf32>
    %110 = tpu.matmul %107, %108, %cst_43 {dimension_numbers = #tpu.dot_dimension_numbers<[1], [1], [0], [0], [0, 0, 1, 0], [], []>} : vector<8x8xf32>, vector<8x8xf32>, vector<8x8xf32> -> vector<8x8xf32>
    %cst_44 = arith.constant 0.353553385 : f32
    %111 = vector.broadcast %cst_44 : f32 to vector<8x8xf32>
    %112 = arith.mulf %110, %111 : vector<8x8xf32>
    %cst_45 = arith.constant dense<0xFF800000> : vector<8xf32>
    %113 = vector.multi_reduction <maximumf>, %112, %cst_45 [1] : vector<8x8xf32> to vector<8xf32>
    %114 = vector.shape_cast %113 : vector<8xf32> to vector<8x1xf32>
    %115 = vector.broadcast %114 : vector<8x1xf32> to vector<8x8xf32>
    %116 = arith.subf %112, %115 : vector<8x8xf32>
    %117 = math.exp %116 : vector<8x8xf32>
    %cst_46 = arith.constant dense<0.000000e+00> : vector<8xf32>
    %118 = vector.multi_reduction <add>, %117, %cst_46 [1] : vector<8x8xf32> to vector<8xf32>
    %119 = vector.shape_cast %118 : vector<8xf32> to vector<8x1xf32>
    %120 = tpu.reciprocal %119 {approx = true} : vector<8x1xf32> -> vector<8x1xf32>
    %121 = vector.broadcast %120 : vector<8x1xf32> to vector<8x8xf32>
    %122 = arith.mulf %117, %121 : vector<8x8xf32>
    %cst_47 = arith.constant dense<0.000000e+00> : vector<8x8xf32>
    %123 = tpu.matmul %122, %109, %cst_47 {dimension_numbers = #tpu.dot_dimension_numbers<[1], [0], [0], [1], [0, 0, 1, 1], [], []>} : vector<8x8xf32>, vector<8x8xf32>, vector<8x8xf32> -> vector<8x8xf32>
    %124 = vector.extract_strided_slice %31 {offsets = [8, 8], sizes = [8, 8], strides = [1, 1]} : vector<16x32xf32> to vector<8x8xf32>
    %125 = vector.extract_strided_slice %36 {offsets = [8, 0], sizes = [8, 8], strides = [1, 1]} : vector<16x16xf32> to vector<8x8xf32>
    %126 = vector.extract_strided_slice %37 {offsets = [8, 0], sizes = [8, 8], strides = [1, 1]} : vector<16x16xf32> to vector<8x8xf32>
    %cst_48 = arith.constant dense<0.000000e+00> : vector<8x8xf32>
    %127 = tpu.matmul %124, %125, %cst_48 {dimension_numbers = #tpu.dot_dimension_numbers<[1], [1], [0], [0], [0, 0, 1, 0], [], []>} : vector<8x8xf32>, vector<8x8xf32>, vector<8x8xf32> -> vector<8x8xf32>
    %cst_49 = arith.constant 0.353553385 : f32
    %128 = vector.broadcast %cst_49 : f32 to vector<8x8xf32>
    %129 = arith.mulf %127, %128 : vector<8x8xf32>
    %cst_50 = arith.constant dense<0xFF800000> : vector<8xf32>
    %130 = vector.multi_reduction <maximumf>, %129, %cst_50 [1] : vector<8x8xf32> to vector<8xf32>
    %131 = vector.shape_cast %130 : vector<8xf32> to vector<8x1xf32>
    %132 = vector.broadcast %131 : vector<8x1xf32> to vector<8x8xf32>
    %133 = arith.subf %129, %132 : vector<8x8xf32>
    %134 = math.exp %133 : vector<8x8xf32>
    %cst_51 = arith.constant dense<0.000000e+00> : vector<8xf32>
    %135 = vector.multi_reduction <add>, %134, %cst_51 [1] : vector<8x8xf32> to vector<8xf32>
    %136 = vector.shape_cast %135 : vector<8xf32> to vector<8x1xf32>
    %137 = tpu.reciprocal %136 {approx = true} : vector<8x1xf32> -> vector<8x1xf32>
    %138 = vector.broadcast %137 : vector<8x1xf32> to vector<8x8xf32>
    %139 = arith.mulf %134, %138 : vector<8x8xf32>
    %cst_52 = arith.constant dense<0.000000e+00> : vector<8x8xf32>
    %140 = tpu.matmul %139, %126, %cst_52 {dimension_numbers = #tpu.dot_dimension_numbers<[1], [0], [0], [1], [0, 0, 1, 1], [], []>} : vector<8x8xf32>, vector<8x8xf32>, vector<8x8xf32> -> vector<8x8xf32>
    %141 = vector.extract_strided_slice %31 {offsets = [8, 16], sizes = [8, 8], strides = [1, 1]} : vector<16x32xf32> to vector<8x8xf32>
    %142 = vector.extract_strided_slice %36 {offsets = [8, 8], sizes = [8, 8], strides = [1, 1]} : vector<16x16xf32> to vector<8x8xf32>
    %143 = vector.extract_strided_slice %37 {offsets = [8, 8], sizes = [8, 8], strides = [1, 1]} : vector<16x16xf32> to vector<8x8xf32>
    %cst_53 = arith.constant dense<0.000000e+00> : vector<8x8xf32>
    %144 = tpu.matmul %141, %142, %cst_53 {dimension_numbers = #tpu.dot_dimension_numbers<[1], [1], [0], [0], [0, 0, 1, 0], [], []>} : vector<8x8xf32>, vector<8x8xf32>, vector<8x8xf32> -> vector<8x8xf32>
    %cst_54 = arith.constant 0.353553385 : f32
    %145 = vector.broadcast %cst_54 : f32 to vector<8x8xf32>
    %146 = arith.mulf %144, %145 : vector<8x8xf32>
    %cst_55 = arith.constant dense<0xFF800000> : vector<8xf32>
    %147 = vector.multi_reduction <maximumf>, %146, %cst_55 [1] : vector<8x8xf32> to vector<8xf32>
    %148 = vector.shape_cast %147 : vector<8xf32> to vector<8x1xf32>
    %149 = vector.broadcast %148 : vector<8x1xf32> to vector<8x8xf32>
    %150 = arith.subf %146, %149 : vector<8x8xf32>
    %151 = math.exp %150 : vector<8x8xf32>
    %cst_56 = arith.constant dense<0.000000e+00> : vector<8xf32>
    %152 = vector.multi_reduction <add>, %151, %cst_56 [1] : vector<8x8xf32> to vector<8xf32>
    %153 = vector.shape_cast %152 : vector<8xf32> to vector<8x1xf32>
    %154 = tpu.reciprocal %153 {approx = true} : vector<8x1xf32> -> vector<8x1xf32>
    %155 = vector.broadcast %154 : vector<8x1xf32> to vector<8x8xf32>
    %156 = arith.mulf %151, %155 : vector<8x8xf32>
    %cst_57 = arith.constant dense<0.000000e+00> : vector<8x8xf32>
    %157 = tpu.matmul %156, %143, %cst_57 {dimension_numbers = #tpu.dot_dimension_numbers<[1], [0], [0], [1], [0, 0, 1, 1], [], []>} : vector<8x8xf32>, vector<8x8xf32>, vector<8x8xf32> -> vector<8x8xf32>
    %158 = vector.extract_strided_slice %31 {offsets = [8, 24], sizes = [8, 8], strides = [1, 1]} : vector<16x32xf32> to vector<8x8xf32>
    %159 = vector.extract_strided_slice %36 {offsets = [8, 8], sizes = [8, 8], strides = [1, 1]} : vector<16x16xf32> to vector<8x8xf32>
    %160 = vector.extract_strided_slice %37 {offsets = [8, 8], sizes = [8, 8], strides = [1, 1]} : vector<16x16xf32> to vector<8x8xf32>
    %cst_58 = arith.constant dense<0.000000e+00> : vector<8x8xf32>
    %161 = tpu.matmul %158, %159, %cst_58 {dimension_numbers = #tpu.dot_dimension_numbers<[1], [1], [0], [0], [0, 0, 1, 0], [], []>} : vector<8x8xf32>, vector<8x8xf32>, vector<8x8xf32> -> vector<8x8xf32>
    %cst_59 = arith.constant 0.353553385 : f32
    %162 = vector.broadcast %cst_59 : f32 to vector<8x8xf32>
    %163 = arith.mulf %161, %162 : vector<8x8xf32>
    %cst_60 = arith.constant dense<0xFF800000> : vector<8xf32>
    %164 = vector.multi_reduction <maximumf>, %163, %cst_60 [1] : vector<8x8xf32> to vector<8xf32>
    %165 = vector.shape_cast %164 : vector<8xf32> to vector<8x1xf32>
    %166 = vector.broadcast %165 : vector<8x1xf32> to vector<8x8xf32>
    %167 = arith.subf %163, %166 : vector<8x8xf32>
    %168 = math.exp %167 : vector<8x8xf32>
    %cst_61 = arith.constant dense<0.000000e+00> : vector<8xf32>
    %169 = vector.multi_reduction <add>, %168, %cst_61 [1] : vector<8x8xf32> to vector<8xf32>
    %170 = vector.shape_cast %169 : vector<8xf32> to vector<8x1xf32>
    %171 = tpu.reciprocal %170 {approx = true} : vector<8x1xf32> -> vector<8x1xf32>
    %172 = vector.broadcast %171 : vector<8x1xf32> to vector<8x8xf32>
    %173 = arith.mulf %168, %172 : vector<8x8xf32>
    %cst_62 = arith.constant dense<0.000000e+00> : vector<8x8xf32>
    %174 = tpu.matmul %173, %160, %cst_62 {dimension_numbers = #tpu.dot_dimension_numbers<[1], [0], [0], [1], [0, 0, 1, 1], [], []>} : vector<8x8xf32>, vector<8x8xf32>, vector<8x8xf32> -> vector<8x8xf32>
    %175 = tpu.concatenate %123, %140, %157, %174 in 1 : vector<8x8xf32>, vector<8x8xf32>, vector<8x8xf32>, vector<8x8xf32> -> vector<8x32xf32>
    %176 = tpu.concatenate %106, %175 in 0 : vector<8x32xf32>, vector<8x32xf32> -> vector<16x32xf32>
    %c0_63 = arith.constant 0 : index
    %c0_64 = arith.constant 0 : index
    %c0_65 = arith.constant 0 : index
    %177 = vector.load %arg9[%c0_63, %c0_64, %c0_65] : memref<2x32x32xf32, #tpu.memory_space<vmem>>, vector<1x32x32xf32>
    %178 = vector.shape_cast %177 : vector<1x32x32xf32> to vector<32x32xf32>
    %cst_66 = arith.constant dense<0.000000e+00> : vector<16x32xf32>
    %179 = tpu.matmul %176, %178, %cst_66 {dimension_numbers = #tpu.dot_dimension_numbers<[1], [0], [0], [1], [0, 0, 1, 1], [], []>} : vector<16x32xf32>, vector<32x32xf32>, vector<16x32xf32> -> vector<16x32xf32>
    %180 = arith.addf %5, %179 : vector<16x32xf32>
    %c0_67 = arith.constant 0 : index
    %c0_68 = arith.constant 0 : index
    %c0_69 = arith.constant 0 : index
    %181 = vector.load %arg10[%c0_67, %c0_68, %c0_69] : memref<2x1x32xf32, #tpu.memory_space<vmem>>, vector<1x1x32xf32>
    %182 = vector.shape_cast %181 : vector<1x1x32xf32> to vector<1x32xf32>
    %183 = arith.mulf %180, %180 : vector<16x32xf32>
    %cst_70 = arith.constant dense<0.000000e+00> : vector<16xf32>
    %184 = vector.multi_reduction <add>, %183, %cst_70 [1] : vector<16x32xf32> to vector<16xf32>
    %185 = vector.shape_cast %184 : vector<16xf32> to vector<16x1xf32>
    %cst_71 = arith.constant 3.200000e+01 : f32
    %186 = vector.broadcast %cst_71 : f32 to vector<16x1xf32>
    %187 = arith.divf %185, %186 : vector<16x1xf32>
    %cst_72 = arith.constant 9.99999974E-6 : f32
    %188 = vector.broadcast %cst_72 : f32 to vector<16x1xf32>
    %189 = arith.addf %187, %188 : vector<16x1xf32>
    %190 = math.rsqrt %189 : vector<16x1xf32>
    %191 = vector.broadcast %190 : vector<16x1xf32> to vector<16x32xf32>
    %192 = arith.mulf %180, %191 : vector<16x32xf32>
    %193 = vector.broadcast %182 : vector<1x32xf32> to vector<16x32xf32>
    %194 = arith.mulf %192, %193 : vector<16x32xf32>
    %c0_73 = arith.constant 0 : index
    %c0_74 = arith.constant 0 : index
    %c0_75 = arith.constant 0 : index
    %195 = vector.load %arg11[%c0_73, %c0_74, %c0_75] : memref<2x32x128xf32, #tpu.memory_space<vmem>>, vector<1x32x128xf32>
    %196 = vector.shape_cast %195 : vector<1x32x128xf32> to vector<32x128xf32>
    %cst_76 = arith.constant dense<0.000000e+00> : vector<16x128xf32>
    %197 = tpu.matmul %194, %196, %cst_76 {dimension_numbers = #tpu.dot_dimension_numbers<[1], [0], [0], [1], [0, 0, 1, 1], [], []>} : vector<16x32xf32>, vector<32x128xf32>, vector<16x128xf32> -> vector<16x128xf32>
    %198 = vector.extract_strided_slice %197 {offsets = [0, 0], sizes = [16, 64], strides = [1, 1]} : vector<16x128xf32> to vector<16x64xf32>
    %199 = vector.extract_strided_slice %197 {offsets = [0, 64], sizes = [16, 64], strides = [1, 1]} : vector<16x128xf32> to vector<16x64xf32>
    %200 = arith.negf %198 : vector<16x64xf32>
    %201 = math.exp %200 : vector<16x64xf32>
    %cst_77 = arith.constant 1.000000e+00 : f32
    %202 = vector.broadcast %cst_77 : f32 to vector<16x64xf32>
    %203 = arith.addf %202, %201 : vector<16x64xf32>
    %204 = arith.divf %202, %203 : vector<16x64xf32>
    %205 = arith.mulf %198, %204 : vector<16x64xf32>
    %206 = arith.mulf %205, %199 : vector<16x64xf32>
    %c0_78 = arith.constant 0 : index
    %c0_79 = arith.constant 0 : index
    %c0_80 = arith.constant 0 : index
    %207 = vector.load %arg12[%c0_78, %c0_79, %c0_80] : memref<2x64x32xf32, #tpu.memory_space<vmem>>, vector<1x64x32xf32>
    %208 = vector.shape_cast %207 : vector<1x64x32xf32> to vector<64x32xf32>
    %cst_81 = arith.constant dense<0.000000e+00> : vector<16x32xf32>
    %209 = tpu.matmul %206, %208, %cst_81 {dimension_numbers = #tpu.dot_dimension_numbers<[1], [0], [0], [1], [0, 0, 1, 1], [], []>} : vector<16x64xf32>, vector<64x32xf32>, vector<16x32xf32> -> vector<16x32xf32>
    %210 = arith.addf %180, %209 : vector<16x32xf32>
    %c1 = arith.constant 1 : index
    %c0_82 = arith.constant 0 : index
    %c0_83 = arith.constant 0 : index
    %211 = vector.load %arg7[%c1, %c0_82, %c0_83] : memref<2x1x32xf32, #tpu.memory_space<vmem>>, vector<1x1x32xf32>
    %212 = vector.shape_cast %211 : vector<1x1x32xf32> to vector<1x32xf32>
    %213 = arith.mulf %210, %210 : vector<16x32xf32>
    %cst_84 = arith.constant dense<0.000000e+00> : vector<16xf32>
    %214 = vector.multi_reduction <add>, %213, %cst_84 [1] : vector<16x32xf32> to vector<16xf32>
    %215 = vector.shape_cast %214 : vector<16xf32> to vector<16x1xf32>
    %cst_85 = arith.constant 3.200000e+01 : f32
    %216 = vector.broadcast %cst_85 : f32 to vector<16x1xf32>
    %217 = arith.divf %215, %216 : vector<16x1xf32>
    %cst_86 = arith.constant 9.99999974E-6 : f32
    %218 = vector.broadcast %cst_86 : f32 to vector<16x1xf32>
    %219 = arith.addf %217, %218 : vector<16x1xf32>
    %220 = math.rsqrt %219 : vector<16x1xf32>
    %221 = vector.broadcast %220 : vector<16x1xf32> to vector<16x32xf32>
    %222 = arith.mulf %210, %221 : vector<16x32xf32>
    %223 = vector.broadcast %212 : vector<1x32xf32> to vector<16x32xf32>
    %224 = arith.mulf %222, %223 : vector<16x32xf32>
    %c1_87 = arith.constant 1 : index
    %c0_88 = arith.constant 0 : index
    %c0_89 = arith.constant 0 : index
    %225 = vector.load %arg8[%c1_87, %c0_88, %c0_89] : memref<2x32x112xf32, #tpu.memory_space<vmem>>, vector<1x32x112xf32>
    %226 = vector.shape_cast %225 : vector<1x32x112xf32> to vector<32x112xf32>
    %cst_90 = arith.constant dense<0.000000e+00> : vector<16x112xf32>
    %227 = tpu.matmul %224, %226, %cst_90 {dimension_numbers = #tpu.dot_dimension_numbers<[1], [0], [0], [1], [0, 0, 1, 1], [], []>} : vector<16x32xf32>, vector<32x112xf32>, vector<16x112xf32> -> vector<16x112xf32>
    %228 = vector.extract_strided_slice %227 {offsets = [0, 0], sizes = [16, 32], strides = [1, 1]} : vector<16x112xf32> to vector<16x32xf32>
    %229 = arith.mulf %228, %6 : vector<16x32xf32>
    %230 = vector.extract_strided_slice %227 {offsets = [0, 32], sizes = [16, 32], strides = [1, 1]} : vector<16x112xf32> to vector<16x32xf32>
    %231 = arith.mulf %230, %7 : vector<16x32xf32>
    %232 = arith.addf %229, %231 : vector<16x32xf32>
    %233 = vector.extract_strided_slice %227 {offsets = [0, 64], sizes = [16, 16], strides = [1, 1]} : vector<16x112xf32> to vector<16x16xf32>
    %234 = arith.mulf %233, %8 : vector<16x16xf32>
    %235 = vector.extract_strided_slice %227 {offsets = [0, 80], sizes = [16, 16], strides = [1, 1]} : vector<16x112xf32> to vector<16x16xf32>
    %236 = arith.mulf %235, %9 : vector<16x16xf32>
    %237 = arith.addf %234, %236 : vector<16x16xf32>
    %238 = vector.extract_strided_slice %227 {offsets = [0, 96], sizes = [16, 16], strides = [1, 1]} : vector<16x112xf32> to vector<16x16xf32>
    %239 = vector.extract_strided_slice %232 {offsets = [0, 0], sizes = [8, 8], strides = [1, 1]} : vector<16x32xf32> to vector<8x8xf32>
    %240 = vector.extract_strided_slice %237 {offsets = [0, 0], sizes = [8, 8], strides = [1, 1]} : vector<16x16xf32> to vector<8x8xf32>
    %241 = vector.extract_strided_slice %238 {offsets = [0, 0], sizes = [8, 8], strides = [1, 1]} : vector<16x16xf32> to vector<8x8xf32>
    %cst_91 = arith.constant dense<0.000000e+00> : vector<8x8xf32>
    %242 = tpu.matmul %239, %240, %cst_91 {dimension_numbers = #tpu.dot_dimension_numbers<[1], [1], [0], [0], [0, 0, 1, 0], [], []>} : vector<8x8xf32>, vector<8x8xf32>, vector<8x8xf32> -> vector<8x8xf32>
    %cst_92 = arith.constant 0.353553385 : f32
    %243 = vector.broadcast %cst_92 : f32 to vector<8x8xf32>
    %244 = arith.mulf %242, %243 : vector<8x8xf32>
    %cst_93 = arith.constant dense<0xFF800000> : vector<8xf32>
    %245 = vector.multi_reduction <maximumf>, %244, %cst_93 [1] : vector<8x8xf32> to vector<8xf32>
    %246 = vector.shape_cast %245 : vector<8xf32> to vector<8x1xf32>
    %247 = vector.broadcast %246 : vector<8x1xf32> to vector<8x8xf32>
    %248 = arith.subf %244, %247 : vector<8x8xf32>
    %249 = math.exp %248 : vector<8x8xf32>
    %cst_94 = arith.constant dense<0.000000e+00> : vector<8xf32>
    %250 = vector.multi_reduction <add>, %249, %cst_94 [1] : vector<8x8xf32> to vector<8xf32>
    %251 = vector.shape_cast %250 : vector<8xf32> to vector<8x1xf32>
    %252 = tpu.reciprocal %251 {approx = true} : vector<8x1xf32> -> vector<8x1xf32>
    %253 = vector.broadcast %252 : vector<8x1xf32> to vector<8x8xf32>
    %254 = arith.mulf %249, %253 : vector<8x8xf32>
    %cst_95 = arith.constant dense<0.000000e+00> : vector<8x8xf32>
    %255 = tpu.matmul %254, %241, %cst_95 {dimension_numbers = #tpu.dot_dimension_numbers<[1], [0], [0], [1], [0, 0, 1, 1], [], []>} : vector<8x8xf32>, vector<8x8xf32>, vector<8x8xf32> -> vector<8x8xf32>
    %256 = vector.extract_strided_slice %232 {offsets = [0, 8], sizes = [8, 8], strides = [1, 1]} : vector<16x32xf32> to vector<8x8xf32>
    %257 = vector.extract_strided_slice %237 {offsets = [0, 0], sizes = [8, 8], strides = [1, 1]} : vector<16x16xf32> to vector<8x8xf32>
    %258 = vector.extract_strided_slice %238 {offsets = [0, 0], sizes = [8, 8], strides = [1, 1]} : vector<16x16xf32> to vector<8x8xf32>
    %cst_96 = arith.constant dense<0.000000e+00> : vector<8x8xf32>
    %259 = tpu.matmul %256, %257, %cst_96 {dimension_numbers = #tpu.dot_dimension_numbers<[1], [1], [0], [0], [0, 0, 1, 0], [], []>} : vector<8x8xf32>, vector<8x8xf32>, vector<8x8xf32> -> vector<8x8xf32>
    %cst_97 = arith.constant 0.353553385 : f32
    %260 = vector.broadcast %cst_97 : f32 to vector<8x8xf32>
    %261 = arith.mulf %259, %260 : vector<8x8xf32>
    %cst_98 = arith.constant dense<0xFF800000> : vector<8xf32>
    %262 = vector.multi_reduction <maximumf>, %261, %cst_98 [1] : vector<8x8xf32> to vector<8xf32>
    %263 = vector.shape_cast %262 : vector<8xf32> to vector<8x1xf32>
    %264 = vector.broadcast %263 : vector<8x1xf32> to vector<8x8xf32>
    %265 = arith.subf %261, %264 : vector<8x8xf32>
    %266 = math.exp %265 : vector<8x8xf32>
    %cst_99 = arith.constant dense<0.000000e+00> : vector<8xf32>
    %267 = vector.multi_reduction <add>, %266, %cst_99 [1] : vector<8x8xf32> to vector<8xf32>
    %268 = vector.shape_cast %267 : vector<8xf32> to vector<8x1xf32>
    %269 = tpu.reciprocal %268 {approx = true} : vector<8x1xf32> -> vector<8x1xf32>
    %270 = vector.broadcast %269 : vector<8x1xf32> to vector<8x8xf32>
    %271 = arith.mulf %266, %270 : vector<8x8xf32>
    %cst_100 = arith.constant dense<0.000000e+00> : vector<8x8xf32>
    %272 = tpu.matmul %271, %258, %cst_100 {dimension_numbers = #tpu.dot_dimension_numbers<[1], [0], [0], [1], [0, 0, 1, 1], [], []>} : vector<8x8xf32>, vector<8x8xf32>, vector<8x8xf32> -> vector<8x8xf32>
    %273 = vector.extract_strided_slice %232 {offsets = [0, 16], sizes = [8, 8], strides = [1, 1]} : vector<16x32xf32> to vector<8x8xf32>
    %274 = vector.extract_strided_slice %237 {offsets = [0, 8], sizes = [8, 8], strides = [1, 1]} : vector<16x16xf32> to vector<8x8xf32>
    %275 = vector.extract_strided_slice %238 {offsets = [0, 8], sizes = [8, 8], strides = [1, 1]} : vector<16x16xf32> to vector<8x8xf32>
    %cst_101 = arith.constant dense<0.000000e+00> : vector<8x8xf32>
    %276 = tpu.matmul %273, %274, %cst_101 {dimension_numbers = #tpu.dot_dimension_numbers<[1], [1], [0], [0], [0, 0, 1, 0], [], []>} : vector<8x8xf32>, vector<8x8xf32>, vector<8x8xf32> -> vector<8x8xf32>
    %cst_102 = arith.constant 0.353553385 : f32
    %277 = vector.broadcast %cst_102 : f32 to vector<8x8xf32>
    %278 = arith.mulf %276, %277 : vector<8x8xf32>
    %cst_103 = arith.constant dense<0xFF800000> : vector<8xf32>
    %279 = vector.multi_reduction <maximumf>, %278, %cst_103 [1] : vector<8x8xf32> to vector<8xf32>
    %280 = vector.shape_cast %279 : vector<8xf32> to vector<8x1xf32>
    %281 = vector.broadcast %280 : vector<8x1xf32> to vector<8x8xf32>
    %282 = arith.subf %278, %281 : vector<8x8xf32>
    %283 = math.exp %282 : vector<8x8xf32>
    %cst_104 = arith.constant dense<0.000000e+00> : vector<8xf32>
    %284 = vector.multi_reduction <add>, %283, %cst_104 [1] : vector<8x8xf32> to vector<8xf32>
    %285 = vector.shape_cast %284 : vector<8xf32> to vector<8x1xf32>
    %286 = tpu.reciprocal %285 {approx = true} : vector<8x1xf32> -> vector<8x1xf32>
    %287 = vector.broadcast %286 : vector<8x1xf32> to vector<8x8xf32>
    %288 = arith.mulf %283, %287 : vector<8x8xf32>
    %cst_105 = arith.constant dense<0.000000e+00> : vector<8x8xf32>
    %289 = tpu.matmul %288, %275, %cst_105 {dimension_numbers = #tpu.dot_dimension_numbers<[1], [0], [0], [1], [0, 0, 1, 1], [], []>} : vector<8x8xf32>, vector<8x8xf32>, vector<8x8xf32> -> vector<8x8xf32>
    %290 = vector.extract_strided_slice %232 {offsets = [0, 24], sizes = [8, 8], strides = [1, 1]} : vector<16x32xf32> to vector<8x8xf32>
    %291 = vector.extract_strided_slice %237 {offsets = [0, 8], sizes = [8, 8], strides = [1, 1]} : vector<16x16xf32> to vector<8x8xf32>
    %292 = vector.extract_strided_slice %238 {offsets = [0, 8], sizes = [8, 8], strides = [1, 1]} : vector<16x16xf32> to vector<8x8xf32>
    %cst_106 = arith.constant dense<0.000000e+00> : vector<8x8xf32>
    %293 = tpu.matmul %290, %291, %cst_106 {dimension_numbers = #tpu.dot_dimension_numbers<[1], [1], [0], [0], [0, 0, 1, 0], [], []>} : vector<8x8xf32>, vector<8x8xf32>, vector<8x8xf32> -> vector<8x8xf32>
    %cst_107 = arith.constant 0.353553385 : f32
    %294 = vector.broadcast %cst_107 : f32 to vector<8x8xf32>
    %295 = arith.mulf %293, %294 : vector<8x8xf32>
    %cst_108 = arith.constant dense<0xFF800000> : vector<8xf32>
    %296 = vector.multi_reduction <maximumf>, %295, %cst_108 [1] : vector<8x8xf32> to vector<8xf32>
    %297 = vector.shape_cast %296 : vector<8xf32> to vector<8x1xf32>
    %298 = vector.broadcast %297 : vector<8x1xf32> to vector<8x8xf32>
    %299 = arith.subf %295, %298 : vector<8x8xf32>
    %300 = math.exp %299 : vector<8x8xf32>
    %cst_109 = arith.constant dense<0.000000e+00> : vector<8xf32>
    %301 = vector.multi_reduction <add>, %300, %cst_109 [1] : vector<8x8xf32> to vector<8xf32>
    %302 = vector.shape_cast %301 : vector<8xf32> to vector<8x1xf32>
    %303 = tpu.reciprocal %302 {approx = true} : vector<8x1xf32> -> vector<8x1xf32>
    %304 = vector.broadcast %303 : vector<8x1xf32> to vector<8x8xf32>
    %305 = arith.mulf %300, %304 : vector<8x8xf32>
    %cst_110 = arith.constant dense<0.000000e+00> : vector<8x8xf32>
    %306 = tpu.matmul %305, %292, %cst_110 {dimension_numbers = #tpu.dot_dimension_numbers<[1], [0], [0], [1], [0, 0, 1, 1], [], []>} : vector<8x8xf32>, vector<8x8xf32>, vector<8x8xf32> -> vector<8x8xf32>
    %307 = tpu.concatenate %255, %272, %289, %306 in 1 : vector<8x8xf32>, vector<8x8xf32>, vector<8x8xf32>, vector<8x8xf32> -> vector<8x32xf32>
    %308 = vector.extract_strided_slice %232 {offsets = [8, 0], sizes = [8, 8], strides = [1, 1]} : vector<16x32xf32> to vector<8x8xf32>
    %309 = vector.extract_strided_slice %237 {offsets = [8, 0], sizes = [8, 8], strides = [1, 1]} : vector<16x16xf32> to vector<8x8xf32>
    %310 = vector.extract_strided_slice %238 {offsets = [8, 0], sizes = [8, 8], strides = [1, 1]} : vector<16x16xf32> to vector<8x8xf32>
    %cst_111 = arith.constant dense<0.000000e+00> : vector<8x8xf32>
    %311 = tpu.matmul %308, %309, %cst_111 {dimension_numbers = #tpu.dot_dimension_numbers<[1], [1], [0], [0], [0, 0, 1, 0], [], []>} : vector<8x8xf32>, vector<8x8xf32>, vector<8x8xf32> -> vector<8x8xf32>
    %cst_112 = arith.constant 0.353553385 : f32
    %312 = vector.broadcast %cst_112 : f32 to vector<8x8xf32>
    %313 = arith.mulf %311, %312 : vector<8x8xf32>
    %cst_113 = arith.constant dense<0xFF800000> : vector<8xf32>
    %314 = vector.multi_reduction <maximumf>, %313, %cst_113 [1] : vector<8x8xf32> to vector<8xf32>
    %315 = vector.shape_cast %314 : vector<8xf32> to vector<8x1xf32>
    %316 = vector.broadcast %315 : vector<8x1xf32> to vector<8x8xf32>
    %317 = arith.subf %313, %316 : vector<8x8xf32>
    %318 = math.exp %317 : vector<8x8xf32>
    %cst_114 = arith.constant dense<0.000000e+00> : vector<8xf32>
    %319 = vector.multi_reduction <add>, %318, %cst_114 [1] : vector<8x8xf32> to vector<8xf32>
    %320 = vector.shape_cast %319 : vector<8xf32> to vector<8x1xf32>
    %321 = tpu.reciprocal %320 {approx = true} : vector<8x1xf32> -> vector<8x1xf32>
    %322 = vector.broadcast %321 : vector<8x1xf32> to vector<8x8xf32>
    %323 = arith.mulf %318, %322 : vector<8x8xf32>
    %cst_115 = arith.constant dense<0.000000e+00> : vector<8x8xf32>
    %324 = tpu.matmul %323, %310, %cst_115 {dimension_numbers = #tpu.dot_dimension_numbers<[1], [0], [0], [1], [0, 0, 1, 1], [], []>} : vector<8x8xf32>, vector<8x8xf32>, vector<8x8xf32> -> vector<8x8xf32>
    %325 = vector.extract_strided_slice %232 {offsets = [8, 8], sizes = [8, 8], strides = [1, 1]} : vector<16x32xf32> to vector<8x8xf32>
    %326 = vector.extract_strided_slice %237 {offsets = [8, 0], sizes = [8, 8], strides = [1, 1]} : vector<16x16xf32> to vector<8x8xf32>
    %327 = vector.extract_strided_slice %238 {offsets = [8, 0], sizes = [8, 8], strides = [1, 1]} : vector<16x16xf32> to vector<8x8xf32>
    %cst_116 = arith.constant dense<0.000000e+00> : vector<8x8xf32>
    %328 = tpu.matmul %325, %326, %cst_116 {dimension_numbers = #tpu.dot_dimension_numbers<[1], [1], [0], [0], [0, 0, 1, 0], [], []>} : vector<8x8xf32>, vector<8x8xf32>, vector<8x8xf32> -> vector<8x8xf32>
    %cst_117 = arith.constant 0.353553385 : f32
    %329 = vector.broadcast %cst_117 : f32 to vector<8x8xf32>
    %330 = arith.mulf %328, %329 : vector<8x8xf32>
    %cst_118 = arith.constant dense<0xFF800000> : vector<8xf32>
    %331 = vector.multi_reduction <maximumf>, %330, %cst_118 [1] : vector<8x8xf32> to vector<8xf32>
    %332 = vector.shape_cast %331 : vector<8xf32> to vector<8x1xf32>
    %333 = vector.broadcast %332 : vector<8x1xf32> to vector<8x8xf32>
    %334 = arith.subf %330, %333 : vector<8x8xf32>
    %335 = math.exp %334 : vector<8x8xf32>
    %cst_119 = arith.constant dense<0.000000e+00> : vector<8xf32>
    %336 = vector.multi_reduction <add>, %335, %cst_119 [1] : vector<8x8xf32> to vector<8xf32>
    %337 = vector.shape_cast %336 : vector<8xf32> to vector<8x1xf32>
    %338 = tpu.reciprocal %337 {approx = true} : vector<8x1xf32> -> vector<8x1xf32>
    %339 = vector.broadcast %338 : vector<8x1xf32> to vector<8x8xf32>
    %340 = arith.mulf %335, %339 : vector<8x8xf32>
    %cst_120 = arith.constant dense<0.000000e+00> : vector<8x8xf32>
    %341 = tpu.matmul %340, %327, %cst_120 {dimension_numbers = #tpu.dot_dimension_numbers<[1], [0], [0], [1], [0, 0, 1, 1], [], []>} : vector<8x8xf32>, vector<8x8xf32>, vector<8x8xf32> -> vector<8x8xf32>
    %342 = vector.extract_strided_slice %232 {offsets = [8, 16], sizes = [8, 8], strides = [1, 1]} : vector<16x32xf32> to vector<8x8xf32>
    %343 = vector.extract_strided_slice %237 {offsets = [8, 8], sizes = [8, 8], strides = [1, 1]} : vector<16x16xf32> to vector<8x8xf32>
    %344 = vector.extract_strided_slice %238 {offsets = [8, 8], sizes = [8, 8], strides = [1, 1]} : vector<16x16xf32> to vector<8x8xf32>
    %cst_121 = arith.constant dense<0.000000e+00> : vector<8x8xf32>
    %345 = tpu.matmul %342, %343, %cst_121 {dimension_numbers = #tpu.dot_dimension_numbers<[1], [1], [0], [0], [0, 0, 1, 0], [], []>} : vector<8x8xf32>, vector<8x8xf32>, vector<8x8xf32> -> vector<8x8xf32>
    %cst_122 = arith.constant 0.353553385 : f32
    %346 = vector.broadcast %cst_122 : f32 to vector<8x8xf32>
    %347 = arith.mulf %345, %346 : vector<8x8xf32>
    %cst_123 = arith.constant dense<0xFF800000> : vector<8xf32>
    %348 = vector.multi_reduction <maximumf>, %347, %cst_123 [1] : vector<8x8xf32> to vector<8xf32>
    %349 = vector.shape_cast %348 : vector<8xf32> to vector<8x1xf32>
    %350 = vector.broadcast %349 : vector<8x1xf32> to vector<8x8xf32>
    %351 = arith.subf %347, %350 : vector<8x8xf32>
    %352 = math.exp %351 : vector<8x8xf32>
    %cst_124 = arith.constant dense<0.000000e+00> : vector<8xf32>
    %353 = vector.multi_reduction <add>, %352, %cst_124 [1] : vector<8x8xf32> to vector<8xf32>
    %354 = vector.shape_cast %353 : vector<8xf32> to vector<8x1xf32>
    %355 = tpu.reciprocal %354 {approx = true} : vector<8x1xf32> -> vector<8x1xf32>
    %356 = vector.broadcast %355 : vector<8x1xf32> to vector<8x8xf32>
    %357 = arith.mulf %352, %356 : vector<8x8xf32>
    %cst_125 = arith.constant dense<0.000000e+00> : vector<8x8xf32>
    %358 = tpu.matmul %357, %344, %cst_125 {dimension_numbers = #tpu.dot_dimension_numbers<[1], [0], [0], [1], [0, 0, 1, 1], [], []>} : vector<8x8xf32>, vector<8x8xf32>, vector<8x8xf32> -> vector<8x8xf32>
    %359 = vector.extract_strided_slice %232 {offsets = [8, 24], sizes = [8, 8], strides = [1, 1]} : vector<16x32xf32> to vector<8x8xf32>
    %360 = vector.extract_strided_slice %237 {offsets = [8, 8], sizes = [8, 8], strides = [1, 1]} : vector<16x16xf32> to vector<8x8xf32>
    %361 = vector.extract_strided_slice %238 {offsets = [8, 8], sizes = [8, 8], strides = [1, 1]} : vector<16x16xf32> to vector<8x8xf32>
    %cst_126 = arith.constant dense<0.000000e+00> : vector<8x8xf32>
    %362 = tpu.matmul %359, %360, %cst_126 {dimension_numbers = #tpu.dot_dimension_numbers<[1], [1], [0], [0], [0, 0, 1, 0], [], []>} : vector<8x8xf32>, vector<8x8xf32>, vector<8x8xf32> -> vector<8x8xf32>
    %cst_127 = arith.constant 0.353553385 : f32
    %363 = vector.broadcast %cst_127 : f32 to vector<8x8xf32>
    %364 = arith.mulf %362, %363 : vector<8x8xf32>
    %cst_128 = arith.constant dense<0xFF800000> : vector<8xf32>
    %365 = vector.multi_reduction <maximumf>, %364, %cst_128 [1] : vector<8x8xf32> to vector<8xf32>
    %366 = vector.shape_cast %365 : vector<8xf32> to vector<8x1xf32>
    %367 = vector.broadcast %366 : vector<8x1xf32> to vector<8x8xf32>
    %368 = arith.subf %364, %367 : vector<8x8xf32>
    %369 = math.exp %368 : vector<8x8xf32>
    %cst_129 = arith.constant dense<0.000000e+00> : vector<8xf32>
    %370 = vector.multi_reduction <add>, %369, %cst_129 [1] : vector<8x8xf32> to vector<8xf32>
    %371 = vector.shape_cast %370 : vector<8xf32> to vector<8x1xf32>
    %372 = tpu.reciprocal %371 {approx = true} : vector<8x1xf32> -> vector<8x1xf32>
    %373 = vector.broadcast %372 : vector<8x1xf32> to vector<8x8xf32>
    %374 = arith.mulf %369, %373 : vector<8x8xf32>
    %cst_130 = arith.constant dense<0.000000e+00> : vector<8x8xf32>
    %375 = tpu.matmul %374, %361, %cst_130 {dimension_numbers = #tpu.dot_dimension_numbers<[1], [0], [0], [1], [0, 0, 1, 1], [], []>} : vector<8x8xf32>, vector<8x8xf32>, vector<8x8xf32> -> vector<8x8xf32>
    %376 = tpu.concatenate %324, %341, %358, %375 in 1 : vector<8x8xf32>, vector<8x8xf32>, vector<8x8xf32>, vector<8x8xf32> -> vector<8x32xf32>
    %377 = tpu.concatenate %307, %376 in 0 : vector<8x32xf32>, vector<8x32xf32> -> vector<16x32xf32>
    %c1_131 = arith.constant 1 : index
    %c0_132 = arith.constant 0 : index
    %c0_133 = arith.constant 0 : index
    %378 = vector.load %arg9[%c1_131, %c0_132, %c0_133] : memref<2x32x32xf32, #tpu.memory_space<vmem>>, vector<1x32x32xf32>
    %379 = vector.shape_cast %378 : vector<1x32x32xf32> to vector<32x32xf32>
    %cst_134 = arith.constant dense<0.000000e+00> : vector<16x32xf32>
    %380 = tpu.matmul %377, %379, %cst_134 {dimension_numbers = #tpu.dot_dimension_numbers<[1], [0], [0], [1], [0, 0, 1, 1], [], []>} : vector<16x32xf32>, vector<32x32xf32>, vector<16x32xf32> -> vector<16x32xf32>
    %381 = arith.addf %210, %380 : vector<16x32xf32>
    %c1_135 = arith.constant 1 : index
    %c0_136 = arith.constant 0 : index
    %c0_137 = arith.constant 0 : index
    %382 = vector.load %arg10[%c1_135, %c0_136, %c0_137] : memref<2x1x32xf32, #tpu.memory_space<vmem>>, vector<1x1x32xf32>
    %383 = vector.shape_cast %382 : vector<1x1x32xf32> to vector<1x32xf32>
    %384 = arith.mulf %381, %381 : vector<16x32xf32>
    %cst_138 = arith.constant dense<0.000000e+00> : vector<16xf32>
    %385 = vector.multi_reduction <add>, %384, %cst_138 [1] : vector<16x32xf32> to vector<16xf32>
    %386 = vector.shape_cast %385 : vector<16xf32> to vector<16x1xf32>
    %cst_139 = arith.constant 3.200000e+01 : f32
    %387 = vector.broadcast %cst_139 : f32 to vector<16x1xf32>
    %388 = arith.divf %386, %387 : vector<16x1xf32>
    %cst_140 = arith.constant 9.99999974E-6 : f32
    %389 = vector.broadcast %cst_140 : f32 to vector<16x1xf32>
    %390 = arith.addf %388, %389 : vector<16x1xf32>
    %391 = math.rsqrt %390 : vector<16x1xf32>
    %392 = vector.broadcast %391 : vector<16x1xf32> to vector<16x32xf32>
    %393 = arith.mulf %381, %392 : vector<16x32xf32>
    %394 = vector.broadcast %383 : vector<1x32xf32> to vector<16x32xf32>
    %395 = arith.mulf %393, %394 : vector<16x32xf32>
    %c1_141 = arith.constant 1 : index
    %c0_142 = arith.constant 0 : index
    %c0_143 = arith.constant 0 : index
    %396 = vector.load %arg11[%c1_141, %c0_142, %c0_143] : memref<2x32x128xf32, #tpu.memory_space<vmem>>, vector<1x32x128xf32>
    %397 = vector.shape_cast %396 : vector<1x32x128xf32> to vector<32x128xf32>
    %cst_144 = arith.constant dense<0.000000e+00> : vector<16x128xf32>
    %398 = tpu.matmul %395, %397, %cst_144 {dimension_numbers = #tpu.dot_dimension_numbers<[1], [0], [0], [1], [0, 0, 1, 1], [], []>} : vector<16x32xf32>, vector<32x128xf32>, vector<16x128xf32> -> vector<16x128xf32>
    %399 = vector.extract_strided_slice %398 {offsets = [0, 0], sizes = [16, 64], strides = [1, 1]} : vector<16x128xf32> to vector<16x64xf32>
    %400 = vector.extract_strided_slice %398 {offsets = [0, 64], sizes = [16, 64], strides = [1, 1]} : vector<16x128xf32> to vector<16x64xf32>
    %401 = arith.negf %399 : vector<16x64xf32>
    %402 = math.exp %401 : vector<16x64xf32>
    %cst_145 = arith.constant 1.000000e+00 : f32
    %403 = vector.broadcast %cst_145 : f32 to vector<16x64xf32>
    %404 = arith.addf %403, %402 : vector<16x64xf32>
    %405 = arith.divf %403, %404 : vector<16x64xf32>
    %406 = arith.mulf %399, %405 : vector<16x64xf32>
    %407 = arith.mulf %406, %400 : vector<16x64xf32>
    %c1_146 = arith.constant 1 : index
    %c0_147 = arith.constant 0 : index
    %c0_148 = arith.constant 0 : index
    %408 = vector.load %arg12[%c1_146, %c0_147, %c0_148] : memref<2x64x32xf32, #tpu.memory_space<vmem>>, vector<1x64x32xf32>
    %409 = vector.shape_cast %408 : vector<1x64x32xf32> to vector<64x32xf32>
    %cst_149 = arith.constant dense<0.000000e+00> : vector<16x32xf32>
    %410 = tpu.matmul %407, %409, %cst_149 {dimension_numbers = #tpu.dot_dimension_numbers<[1], [0], [0], [1], [0, 0, 1, 1], [], []>} : vector<16x64xf32>, vector<64x32xf32>, vector<16x32xf32> -> vector<16x32xf32>
    %411 = arith.addf %381, %410 : vector<16x32xf32>
    %c0_150 = arith.constant 0 : index
    %c0_151 = arith.constant 0 : index
    %412 = vector.load %arg13[%c0_150, %c0_151] : memref<1x32xf32, #tpu.memory_space<vmem>>, vector<1x32xf32>
    %413 = arith.mulf %411, %411 : vector<16x32xf32>
    %cst_152 = arith.constant dense<0.000000e+00> : vector<16xf32>
    %414 = vector.multi_reduction <add>, %413, %cst_152 [1] : vector<16x32xf32> to vector<16xf32>
    %415 = vector.shape_cast %414 : vector<16xf32> to vector<16x1xf32>
    %cst_153 = arith.constant 3.200000e+01 : f32
    %416 = vector.broadcast %cst_153 : f32 to vector<16x1xf32>
    %417 = arith.divf %415, %416 : vector<16x1xf32>
    %cst_154 = arith.constant 9.99999974E-6 : f32
    %418 = vector.broadcast %cst_154 : f32 to vector<16x1xf32>
    %419 = arith.addf %417, %418 : vector<16x1xf32>
    %420 = math.rsqrt %419 : vector<16x1xf32>
    %421 = vector.broadcast %420 : vector<16x1xf32> to vector<16x32xf32>
    %422 = arith.mulf %411, %421 : vector<16x32xf32>
    %423 = vector.broadcast %412 : vector<1x32xf32> to vector<16x32xf32>
    %424 = arith.mulf %422, %423 : vector<16x32xf32>
    %425 = vector.extract_strided_slice %424 {offsets = [0, 0], sizes = [8, 32], strides = [1, 1]} : vector<16x32xf32> to vector<8x32xf32>
    %cst_155 = arith.constant dense<0.000000e+00> : vector<32xf32>
    %426 = vector.multi_reduction <add>, %425, %cst_155 [0] : vector<8x32xf32> to vector<32xf32>
    %427 = vector.shape_cast %426 : vector<32xf32> to vector<1x32xf32>
    %cst_156 = arith.constant 8.000000e+00 : f32
    %428 = vector.broadcast %cst_156 : f32 to vector<1x32xf32>
    %429 = arith.divf %427, %428 : vector<1x32xf32>
    %430 = vector.extract_strided_slice %424 {offsets = [8, 0], sizes = [8, 32], strides = [1, 1]} : vector<16x32xf32> to vector<8x32xf32>
    %cst_157 = arith.constant dense<0.000000e+00> : vector<32xf32>
    %431 = vector.multi_reduction <add>, %430, %cst_157 [0] : vector<8x32xf32> to vector<32xf32>
    %432 = vector.shape_cast %431 : vector<32xf32> to vector<1x32xf32>
    %cst_158 = arith.constant 8.000000e+00 : f32
    %433 = vector.broadcast %cst_158 : f32 to vector<1x32xf32>
    %434 = arith.divf %432, %433 : vector<1x32xf32>
    %435 = tpu.concatenate %429, %434 in 0 : vector<1x32xf32>, vector<1x32xf32> -> vector<2x32xf32>
    %c0_159 = arith.constant 0 : index
    %c0_160 = arith.constant 0 : index
    %436 = vector.load %arg14[%c0_159, %c0_160] : memref<32x128xf32, #tpu.memory_space<vmem>>, vector<32x128xf32>
    %cst_161 = arith.constant dense<0.000000e+00> : vector<2x128xf32>
    %437 = tpu.matmul %435, %436, %cst_161 {dimension_numbers = #tpu.dot_dimension_numbers<[1], [0], [0], [1], [0, 0, 1, 1], [], []>} : vector<2x32xf32>, vector<32x128xf32>, vector<2x128xf32> -> vector<2x128xf32>
    %c0_162 = arith.constant 0 : index
    %c0_163 = arith.constant 0 : index
    %438 = vector.load %arg15[%c0_162, %c0_163] : memref<1x128xf32, #tpu.memory_space<vmem>>, vector<1x128xf32>
    %439 = vector.broadcast %438 : vector<1x128xf32> to vector<2x128xf32>
    %440 = arith.addf %437, %439 : vector<2x128xf32>
    %c0_164 = arith.constant 0 : index
    %c0_165 = arith.constant 0 : index
    %441 = vector.load %arg16[%c0_164, %c0_165] : memref<2x128xf32, #tpu.memory_space<vmem>>, vector<2x128xf32>
    tpu.vector_store %arg16[%c0_164, %c0_165], %440 {strides = array<i32>} : memref<2x128xf32, #tpu.memory_space<vmem>>, vector<2x128xf32>,
    return
  }
}

</mosaic_0001>

<llo_original>
// kernel: tpu_custom_call.1
$region0: #{tpu_custom_call.1}
  #allocation0 [shape = 'u32[]', space=smem, size = 0x4, offset = 0x4, fixed_abs, tag = 'smem constant byte address 0x4 - core index']
  #allocation1 [shape = 'u32[72,128]{1,0:T(1,128)}', space=vmem, size = 0x9000, scoped, tag = 'internal scratch']
  %s0 = inlined_call_operand.hbm [shape: f32[16,16], index: 0, kind: input, shape index: {}]
  %s1 = inlined_call_operand.hbm [shape: f32[16,32], index: 1, kind: input, shape index: {}]
  %s2 = inlined_call_operand.hbm [shape: f32[1,32], index: 2, kind: input, shape index: {}]
  %s3 = inlined_call_operand.hbm [shape: f32[16,32], index: 3, kind: input, shape index: {}]
  %s4 = inlined_call_operand.hbm [shape: f32[16,32], index: 4, kind: input, shape index: {}]
  %s5 = inlined_call_operand.hbm [shape: f32[16,16], index: 5, kind: input, shape index: {}]
  %s6 = inlined_call_operand.hbm [shape: f32[16,16], index: 6, kind: input, shape index: {}]
  %s7 = inlined_call_operand.vmem [shape: f32[2,1,32], index: 7, kind: input, shape index: {}]
  %s8 = inlined_call_operand.vmem [shape: f32[2,32,112], index: 8, kind: input, shape index: {}]
  %s9 = inlined_call_operand.vmem [shape: f32[2,32,32], index: 9, kind: input, shape index: {}]
  %s10 = inlined_call_operand.vmem [shape: f32[2,1,32], index: 10, kind: input, shape index: {}]
  %s11 = inlined_call_operand.vmem [shape: f32[2,32,128], index: 11, kind: input, shape index: {}]
  %s12 = inlined_call_operand.vmem [shape: f32[2,64,32], index: 12, kind: input, shape index: {}]
  %s13 = inlined_call_operand.vmem [shape: f32[1,32], index: 13, kind: input, shape index: {}]
  %s14 = inlined_call_operand.hbm [shape: f32[32,128], index: 14, kind: input, shape index: {}]
  %s15 = inlined_call_operand.vmem [shape: f32[1,128], index: 15, kind: input, shape index: {}]
  %s16 = inlined_call_operand.hbm [shape: f32[2,128], index: 16, kind: output, shape index: {}]
  %s17 = sld [smem:[#allocation0]]
  $region106: #{tpu_custom_call.1} parent=0
    _
  %s19 = ssub.s32 1, %s17
  %s20 = scalar_select 0, %s19, %s17
  $region1: #{tpu_custom_call.1} parent=0
    #allocation2 [shape = 'u8[8192]{0}', space=vmem, size = 0x2000, scoped, tag = 'input window, operand 0, single buffered']
    #allocation3 [shape = 's32[1]{0}', space=sflag, size = 0x4, scoped, tag = 'scoped memory for tpu_custom_call.1']
    #allocation4 [shape = 's32[1]{0}', space=sflag, size = 0x4, scoped, tag = 'scoped memory for tpu_custom_call.1']
    #allocation5 [shape = 'u8[8192]{0}', space=vmem, size = 0x2000, scoped, tag = 'input window, operand 1, single buffered']
    #allocation6 [shape = 's32[1]{0}', space=sflag, size = 0x4, scoped, tag = 'scoped memory for tpu_custom_call.1']
    #allocation7 [shape = 'u8[512]{0}', space=vmem, size = 0x400, scoped, tag = 'input window, operand 2, single buffered']
    #allocation8 [shape = 'u8[8192]{0}', space=vmem, size = 0x2000, scoped, tag = 'input window, operand 3, single buffered']
    #allocation9 [shape = 's32[1]{0}', space=sflag, size = 0x4, scoped, tag = 'scoped memory for tpu_custom_call.1']
    #allocation10 [shape = 'u8[8192]{0}', space=vmem, size = 0x2000, scoped, tag = 'input window, operand 4, single buffered']
    #allocation11 [shape = 'u8[8192]{0}', space=vmem, size = 0x2000, scoped, tag = 'input window, operand 5, single buffered']
    #allocation12 [shape = 's32[1]{0}', space=sflag, size = 0x4, scoped, tag = 'scoped memory for tpu_custom_call.1']
    #allocation13 [shape = 'u8[8192]{0}', space=vmem, size = 0x2000, scoped, tag = 'input window, operand 6, single buffered']
    #allocation14 [shape = 'u8[16384]{0}', space=vmem, size = 0x4000, scoped, tag = 'input window, operand 14, single buffered']
    #allocation15 [shape = 's32[1]{0}', space=sflag, size = 0x4, scoped, tag = 'scoped memory for tpu_custom_call.1']
    #allocation16 [shape = 'u8[1024]{0}', space=vmem, size = 0x400, scoped, tag = 'output window, operand 0, single buffered']
    %21 = vsyncpa [#allocation3], 0
    %22 = vsyncpa [#allocation6], 0
    %23 = vsyncpa [#allocation9], 0
    %24 = vsyncpa [#allocation12], 0
    %25 = vsyncpa [#allocation15], 0
    %26 = vsyncpa [#allocation4], 0
    // Predicated region
    $region2: #{tpu_custom_call.1} parent=1 // pred_check
      _
    $region3: #{tpu_custom_call.1} parent=1 // pred_check_branch
      %28 = sbr.rel (0) target = $region5
    $region4: #{tpu_custom_call.1} parent=1 // pred_region
      %30 = vsyncadd [#allocation3], 0
      %s31 = sshll.u32 %s0, 4
      %s32 = int_to_ptr.hbm [resolvable:$true] %s31
      %s33 = sshll.u32 [#allocation2], 4
      %s34 = int_to_ptr.vmem [resolvable:$true] %s33
      %39 = dma.hbm_to_vmem [thread:$0]  %s32, 256, %s34, [#allocation3], 128, 128, 8
    $region5: #{tpu_custom_call.1} parent=1 // pred_fallthru
      _
    // Predicated region
    $region6: #{tpu_custom_call.1} parent=1 // pred_check
      _
    $region7: #{tpu_custom_call.1} parent=1 // pred_check_branch
      %41 = sbr.rel (0) target = $region9
    $region8: #{tpu_custom_call.1} parent=1 // pred_region
      %43 = vsyncadd [#allocation6], 0
      %s44 = sshll.u32 %s1, 4
      %s45 = int_to_ptr.hbm [resolvable:$true] %s44
      %s46 = sshll.u32 [#allocation5], 4
      %s47 = int_to_ptr.vmem [resolvable:$true] %s46
      %52 = dma.hbm_to_vmem [thread:$0]  %s45, 256, %s47, [#allocation6], 128, 128, 8
    $region9: #{tpu_custom_call.1} parent=1 // pred_fallthru
      _
    // Predicated region
    $region10: #{tpu_custom_call.1} parent=1 // pred_check
      _
    $region11: #{tpu_custom_call.1} parent=1 // pred_check_branch
      %54 = sbr.rel (0) target = $region13
    $region12: #{tpu_custom_call.1} parent=1 // pred_region
      %56 = vsyncadd [#allocation6], 0
      %s58 = sshll.u32 %s2, 4
      %s59 = int_to_ptr.hbm [resolvable:$true] %s58
      %s60 = sshll.u32 [#allocation7], 4
      %s61 = int_to_ptr.vmem [resolvable:$true] %s60
      %63 = dma.hbm_to_vmem [thread:$0]  %s59, 16, %s61, [#allocation6]
    $region13: #{tpu_custom_call.1} parent=1 // pred_fallthru
      _
    // Predicated region
    $region14: #{tpu_custom_call.1} parent=1 // pred_check
      _
    $region15: #{tpu_custom_call.1} parent=1 // pred_check_branch
      %65 = sbr.rel (0) target = $region17
    $region16: #{tpu_custom_call.1} parent=1 // pred_region
      %67 = vsyncadd [#allocation9], 0
      %s68 = sshll.u32 %s3, 4
      %s69 = int_to_ptr.hbm [resolvable:$true] %s68
      %s70 = sshll.u32 [#allocation8], 4
      %s71 = int_to_ptr.vmem [resolvable:$true] %s70
      %76 = dma.hbm_to_vmem [thread:$0]  %s69, 256, %s71, [#allocation9], 128, 128, 8
    $region17: #{tpu_custom_call.1} parent=1 // pred_fallthru
      _
    // Predicated region
    $region18: #{tpu_custom_call.1} parent=1 // pred_check
      _
    $region19: #{tpu_custom_call.1} parent=1 // pred_check_branch
      %78 = sbr.rel (0) target = $region21
    $region20: #{tpu_custom_call.1} parent=1 // pred_region
      %80 = vsyncadd [#allocation9], 0
      %s81 = sshll.u32 %s4, 4
      %s82 = int_to_ptr.hbm [resolvable:$true] %s81
      %s83 = sshll.u32 [#allocation10], 4
      %s84 = int_to_ptr.vmem [resolvable:$true] %s83
      %89 = dma.hbm_to_vmem [thread:$0]  %s82, 256, %s84, [#allocation9], 128, 128, 8
    $region21: #{tpu_custom_call.1} parent=1 // pred_fallthru
      _
    // Predicated region
    $region22: #{tpu_custom_call.1} parent=1 // pred_check
      _
    $region23: #{tpu_custom_call.1} parent=1 // pred_check_branch
      %91 = sbr.rel (0) target = $region25
    $region24: #{tpu_custom_call.1} parent=1 // pred_region
      %93 = vsyncadd [#allocation12], 0
      %s94 = sshll.u32 %s5, 4
      %s95 = int_to_ptr.hbm [resolvable:$true] %s94
      %s96 = sshll.u32 [#allocation11], 4
      %s97 = int_to_ptr.vmem [resolvable:$true] %s96
      %102 = dma.hbm_to_vmem [thread:$0]  %s95, 256, %s97, [#allocation12], 128, 128, 8
    $region25: #{tpu_custom_call.1} parent=1 // pred_fallthru
      _
    // Predicated region
    $region26: #{tpu_custom_call.1} parent=1 // pred_check
      _
    $region27: #{tpu_custom_call.1} parent=1 // pred_check_branch
      %104 = sbr.rel (0) target = $region29
    $region28: #{tpu_custom_call.1} parent=1 // pred_region
      %106 = vsyncadd [#allocation12], 0
      %s107 = sshll.u32 %s6, 4
      %s108 = int_to_ptr.hbm [resolvable:$true] %s107
      %s109 = sshll.u32 [#allocation13], 4
      %s110 = int_to_ptr.vmem [resolvable:$true] %s109
      %115 = dma.hbm_to_vmem [thread:$0]  %s108, 256, %s110, [#allocation12], 128, 128, 8
    $region29: #{tpu_custom_call.1} parent=1 // pred_fallthru
      _
    // Predicated region
    $region30: #{tpu_custom_call.1} parent=1 // pred_check
      _
    $region31: #{tpu_custom_call.1} parent=1 // pred_check_branch
      %117 = sbr.rel (0) target = $region33
    $region32: #{tpu_custom_call.1} parent=1 // pred_region
      _
    $region33: #{tpu_custom_call.1} parent=1 // pred_fallthru
      _
    // Predicated region
    $region34: #{tpu_custom_call.1} parent=1 // pred_check
      _
    $region35: #{tpu_custom_call.1} parent=1 // pred_check_branch
      %119 = sbr.rel (0) target = $region37
    $region36: #{tpu_custom_call.1} parent=1 // pred_region
      _
    $region37: #{tpu_custom_call.1} parent=1 // pred_fallthru
      _
    // Predicated region
    $region38: #{tpu_custom_call.1} parent=1 // pred_check
      _
    $region39: #{tpu_custom_call.1} parent=1 // pred_check_branch
      %121 = sbr.rel (0) target = $region41
    $region40: #{tpu_custom_call.1} parent=1 // pred_region
      _
    $region41: #{tpu_custom_call.1} parent=1 // pred_fallthru
      _
    // Predicated region
    $region42: #{tpu_custom_call.1} parent=1 // pred_check
      _
    $region43: #{tpu_custom_call.1} parent=1 // pred_check_branch
      %123 = sbr.rel (0) target = $region45
    $region44: #{tpu_custom_call.1} parent=1 // pred_region
      _
    $region45: #{tpu_custom_call.1} parent=1 // pred_fallthru
      _
    // Predicated region
    $region46: #{tpu_custom_call.1} parent=1 // pred_check
      _
    $region47: #{tpu_custom_call.1} parent=1 // pred_check_branch
      %125 = sbr.rel (0) target = $region49
    $region48: #{tpu_custom_call.1} parent=1 // pred_region
      _
    $region49: #{tpu_custom_call.1} parent=1 // pred_fallthru
      _
    // Predicated region
    $region50: #{tpu_custom_call.1} parent=1 // pred_check
      _
    $region51: #{tpu_custom_call.1} parent=1 // pred_check_branch
      %127 = sbr.rel (0) target = $region53
    $region52: #{tpu_custom_call.1} parent=1 // pred_region
      _
    $region53: #{tpu_custom_call.1} parent=1 // pred_fallthru
      _
    // Predicated region
    $region54: #{tpu_custom_call.1} parent=1 // pred_check
      _
    $region55: #{tpu_custom_call.1} parent=1 // pred_check_branch
      %129 = sbr.rel (0) target = $region57
    $region56: #{tpu_custom_call.1} parent=1 // pred_region
      _
    $region57: #{tpu_custom_call.1} parent=1 // pred_fallthru
      _
    // Predicated region
    $region58: #{tpu_custom_call.1} parent=1 // pred_check
      _
    $region59: #{tpu_custom_call.1} parent=1 // pred_check_branch
      %131 = sbr.rel (0) target = $region61
    $region60: #{tpu_custom_call.1} parent=1 // pred_region
      %133 = vsyncadd [#allocation15], 0
      %s134 = sshll.u32 %s14, 4
      %s135 = int_to_ptr.hbm [resolvable:$true] %s134
      %s136 = sshll.u32 [#allocation14], 4
      %s137 = int_to_ptr.vmem [resolvable:$true] %s136
      %142 = dma.hbm_to_vmem [thread:$0]  %s135, 512, %s137, [#allocation15], 128, 128, 8
    $region61: #{tpu_custom_call.1} parent=1 // pred_fallthru
      _
    // Predicated region
    $region62: #{tpu_custom_call.1} parent=1 // pred_check
      _
    $region63: #{tpu_custom_call.1} parent=1 // pred_check_branch
      %144 = sbr.rel (0) target = $region65
    $region64: #{tpu_custom_call.1} parent=1 // pred_region
      _
    $region65: #{tpu_custom_call.1} parent=1 // pred_fallthru
      _
    // Predicated region
    $region66: #{tpu_custom_call.1} parent=1 // pred_check
      _
    $region67: #{tpu_custom_call.1} parent=1 // pred_check_branch
      %146 = sbr.rel (0) target = $region69
    $region68: #{tpu_custom_call.1} parent=1 // pred_region
      %148 = dma.done [#allocation3], 256
    $region69: #{tpu_custom_call.1} parent=1 // pred_fallthru
      _
    // Predicated region
    $region70: #{tpu_custom_call.1} parent=1 // pred_check
      _
    $region71: #{tpu_custom_call.1} parent=1 // pred_check_branch
      %150 = sbr.rel (0) target = $region73
    $region72: #{tpu_custom_call.1} parent=1 // pred_region
      %152 = dma.done [#allocation6], 256
    $region73: #{tpu_custom_call.1} parent=1 // pred_fallthru
      _
    // Predicated region
    $region74: #{tpu_custom_call.1} parent=1 // pred_check
      _
    $region75: #{tpu_custom_call.1} parent=1 // pred_check_branch
      %154 = sbr.rel (0) target = $region77
    $region76: #{tpu_custom_call.1} parent=1 // pred_region
      %156 = dma.done [#allocation6], 16
    $region77: #{tpu_custom_call.1} parent=1 // pred_fallthru
      _
    // Predicated region
    $region78: #{tpu_custom_call.1} parent=1 // pred_check
      _
    $region79: #{tpu_custom_call.1} parent=1 // pred_check_branch
      %158 = sbr.rel (0) target = $region81
    $region80: #{tpu_custom_call.1} parent=1 // pred_region
      %160 = dma.done [#allocation9], 256
    $region81: #{tpu_custom_call.1} parent=1 // pred_fallthru
      _
    // Predicated region
    $region82: #{tpu_custom_call.1} parent=1 // pred_check
      _
    $region83: #{tpu_custom_call.1} parent=1 // pred_check_branch
      %162 = sbr.rel (0) target = $region85
    $region84: #{tpu_custom_call.1} parent=1 // pred_region
      %164 = dma.done [#allocation9], 256
    $region85: #{tpu_custom_call.1} parent=1 // pred_fallthru
      _
    // Predicated region
    $region86: #{tpu_custom_call.1} parent=1 // pred_check
      _
    $region87: #{tpu_custom_call.1} parent=1 // pred_check_branch
      %166 = sbr.rel (0) target = $region89
    $region88: #{tpu_custom_call.1} parent=1 // pred_region
      %168 = dma.done [#allocation12], 256
    $region89: #{tpu_custom_call.1} parent=1 // pred_fallthru
      _
    // Predicated region
    $region90: #{tpu_custom_call.1} parent=1 // pred_check
      _
    $region91: #{tpu_custom_call.1} parent=1 // pred_check_branch
      %170 = sbr.rel (0) target = $region93
    $region92: #{tpu_custom_call.1} parent=1 // pred_region
      %172 = dma.done [#allocation12], 256
    $region93: #{tpu_custom_call.1} parent=1 // pred_fallthru
      _
    // Predicated region
    $region94: #{tpu_custom_call.1} parent=1 // pred_check
      _
    $region95: #{tpu_custom_call.1} parent=1 // pred_check_branch
      %174 = sbr.rel (0) target = $region97
    $region96: #{tpu_custom_call.1} parent=1 // pred_region
      %176 = dma.done [#allocation15], 512
    $region97: #{tpu_custom_call.1} parent=1 // pred_fallthru
      _
    %v177 = vld [vmem:[#allocation2] sm:$0xff]
    %v178 = vld [vmem:[#allocation2 + $0x8] sm:$0xff]
    %v179 = vld [vmem:[#allocation5] sm:$0xff]
    %v180 = vld [vmem:[#allocation5 + $0x8] sm:$0xff]
    %v181 = vld [vmem:[#allocation7] sm:$0x1]
    %v183 = vperm.slane %v181, 0
    %vm185 = vcmask 130048
    %v187 = vsel %vm185, %v177, 0
    %v190 = vsel %vm185, %v178, 0
    %192 = vmatpush.msra.mxu0 0.0
    %193 = vmatpush.msra.mxu0 0.0
    %194 = vmatpush.msra.mxu0 0.0
    %195 = vmatpush.msra.mxu0 0.0
    %196 = vmatpush.msra.mxu0 0.0
    %197 = vmatpush.msra.mxu0 0.0
    %198 = vmatpush.msra.mxu0 0.0
    %199 = vmatpush.msra.mxu0 0.0
    %200 = vmatpush.msra.mxu0 0.0
    %201 = vmatpush.msra.mxu0 0.0
    %202 = vmatpush.msra.mxu0 0.0
    %203 = vmatpush.msra.mxu0 0.0
    %204 = vmatpush.msra.mxu0 0.0
    %205 = vmatpush.msra.mxu0 0.0
    %206 = vmatpush.msra.mxu0 %v180
    %207 = vmatpush.msra.mxu0 %v179
    %208 = vmatmul.f32.gmra.mxu0 %v187
    %v209 = vpop.f32.mrf.mxu0
    %v210 = vadd.f32 %v183, %v209
    %211 = vmatmul.f32.gmra.mxu0 %v190
    %v212 = vpop.f32.mrf.mxu0
    %v213 = vadd.f32 %v183, %v212
    %214 = vdwg.mxu0
    %v215 = vld [vmem:[#allocation8] sm:$0xff]
    %v216 = vld [vmem:[#allocation8 + $0x8] sm:$0xff]
    %v217 = vld [vmem:[#allocation10] sm:$0xff]
    %v218 = vld [vmem:[#allocation10 + $0x8] sm:$0xff]
    %v219 = vld [vmem:[#allocation11] sm:$0xff]
    %v220 = vld [vmem:[#allocation11 + $0x8] sm:$0xff]
    %v221 = vld [vmem:[#allocation13] sm:$0xff]
    %v222 = vld [vmem:[#allocation13 + $0x8] sm:$0xff]
    %v223 = vld [vmem:[%s7] sm:$0x1]
    %v224 = vmul.f32 %v210, %v210
    %v225 = vmul.f32 %v213, %v213
    %vm226 = vcmask 261120
    %v227 = vsel %vm226, %v224, 0.0
    %228 = vadd.xlane.f32.xlu0 %v227
    %v229 = vpop.xlane.xlu0 %228
    %v230 = vsel %vm226, %v225, 0.0
    %231 = vadd.xlane.f32.xlu0 %v230
    %v232 = vpop.xlane.xlu0 %231
    %v233 = vrcp.pop 32.0
    %v234 = vmul.f32 32.0, %v233
    %v235 = vsub.f32 1.0, %v234
    %v236 = vmul.f32 %v233, %v235
    %v237 = vadd.f32 %v233, %v236
    %vm238 = vweird.f32 %v233
    %v239 = vsel %vm238, %v233, %v237
    %v240 = vmul.f32 %v229, %v239
    %v241 = vmul.f32 %v232, %v239
    %v242 = vadd.f32 %v240, 1e-05
    %v243 = vadd.f32 %v241, 1e-05
    %v244 = vrsqrt.pop %v242
    %v245 = vmul.f32 %v244, %v242
    %v246 = vmul.f32 %v245, %v244
    %v247 = vmul.f32 0.5, %v246
    %v248 = vsub.f32 1.5, %v247
    %v249 = vmul.f32 %v244, %v248
    %vm250 = vweird.f32 %v242
    %vm251 = vweird.f32 %v244
    %vm252 = vmor %vm250, %vm251
    %v253 = vsel %vm252, %v244, %v249
    %v254 = vrsqrt.pop %v243
    %v255 = vmul.f32 %v254, %v243
    %v256 = vmul.f32 %v255, %v254
    %v257 = vmul.f32 0.5, %v256
    %v258 = vsub.f32 1.5, %v257
    %v259 = vmul.f32 %v254, %v258
    %vm260 = vweird.f32 %v243
    %vm261 = vweird.f32 %v254
    %vm262 = vmor %vm260, %vm261
    %v263 = vsel %vm262, %v254, %v259
    %v264 = vmul.f32 %v210, %v253
    %v265 = vmul.f32 %v213, %v263
    %v267 = vperm.slane %v223, 0
    %v269 = vmul.f32 %v264, %v267
    %v270 = vmul.f32 %v265, %v267
    %v271 = vld [vmem:[%s8] sm:$0xff]
    %v272 = vld [vmem:[%s8 + $0x8] sm:$0xff]
    %v273 = vld [vmem:[%s8 + $0x10] sm:$0xff]
    %v274 = vld [vmem:[%s8 + $0x18] sm:$0xff]
    %v276 = vsel %vm226, %v269, 0
    %v279 = vsel %vm226, %v270, 0
    %281 = vmatpush.msra.mxu0 0.0
    %282 = vmatpush.msra.mxu0 0.0
    %283 = vmatpush.msra.mxu0 0.0
    %284 = vmatpush.msra.mxu0 0.0
    %285 = vmatpush.msra.mxu0 0.0
    %286 = vmatpush.msra.mxu0 0.0
    %287 = vmatpush.msra.mxu0 0.0
    %288 = vmatpush.msra.mxu0 0.0
    %289 = vmatpush.msra.mxu0 0.0
    %290 = vmatpush.msra.mxu0 0.0
    %291 = vmatpush.msra.mxu0 0.0
    %292 = vmatpush.msra.mxu0 0.0
    %293 = vmatpush.msra.mxu0 %v274
    %294 = vmatpush.msra.mxu0 %v273
    %295 = vmatpush.msra.mxu0 %v272
    %296 = vmatpush.msra.mxu0 %v271
    %297 = vmatmul.f32.gmra.mxu0 %v276
    %v298 = vpop.f32.mrf.mxu0
    %v299 = vadd.f32 0.0, %v298
    %300 = vmatmul.f32.gmra.mxu0 %v279
    %v301 = vpop.f32.mrf.mxu0
    %v302 = vadd.f32 0.0, %v301
    %303 = vdwg.mxu0
    %v304 = vmul.f32 %v299, %v215
    %v305 = vmul.f32 %v302, %v216
    %308 = vrot.lane.b32.xlu0 %v217, 32
    %v309 = vpop.permute.xlu0 %308
    %310 = vrot.lane.b32.xlu0 %v218, 32
    %v311 = vpop.permute.xlu0 %310
    %v314 = vmul.f32 %v299, %v309
    %v315 = vmul.f32 %v302, %v311
    %318 = vrot.lane.b32.xlu0 %v314, 96
    %v319 = vpop.permute.xlu0 %318
    %320 = vrot.lane.b32.xlu0 %v315, 96
    %v321 = vpop.permute.xlu0 %320
    %v324 = vadd.f32 %v304, %v319
    %v325 = vadd.f32 %v305, %v321
    %328 = vrot.lane.b32.xlu0 %v219, 64
    %v329 = vpop.permute.xlu0 %328
    %330 = vrot.lane.b32.xlu0 %v220, 64
    %v331 = vpop.permute.xlu0 %330
    %v334 = vmul.f32 %v299, %v329
    %v335 = vmul.f32 %v302, %v331
    %338 = vrot.lane.b32.xlu0 %v221, 80
    %v339 = vpop.permute.xlu0 %338
    %340 = vrot.lane.b32.xlu0 %v222, 80
    %v341 = vpop.permute.xlu0 %340
    %v344 = vmul.f32 %v299, %v339
    %v345 = vmul.f32 %v302, %v341
    %348 = vrot.lane.b32.xlu0 %v344, 112
    %v349 = vpop.permute.xlu0 %348
    %350 = vrot.lane.b32.xlu0 %v345, 112
    %v351 = vpop.permute.xlu0 %350
    %v354 = vadd.f32 %v334, %v349
    %v355 = vadd.f32 %v335, %v351
    %357 = vrot.lane.b32.xlu0 %v354, 64
    %v358 = vpop.permute.xlu0 %357
    %vm359 = vcmask 64512
    %v361 = vsel %vm359, %v324, 0
    %v363 = vsel %vm359, %v358, 0
    %365 = vmatpush.xpose.msra.mxu0 0.0
    %366 = vmatpush.xpose.msra.mxu0 0.0
    %367 = vmatpush.xpose.msra.mxu0 0.0
    %368 = vmatpush.xpose.msra.mxu0 0.0
    %369 = vmatpush.xpose.msra.mxu0 0.0
    %370 = vmatpush.xpose.msra.mxu0 0.0
    %371 = vmatpush.xpose.msra.mxu0 0.0
    %372 = vmatpush.xpose.msra.mxu0 0.0
    %373 = vmatpush.xpose.msra.mxu0 0.0
    %374 = vmatpush.xpose.msra.mxu0 0.0
    %375 = vmatpush.xpose.msra.mxu0 0.0
    %376 = vmatpush.xpose.msra.mxu0 0.0
    %377 = vmatpush.xpose.msra.mxu0 0.0
    %378 = vmatpush.xpose.msra.mxu0 0.0
    %379 = vmatpush.xpose.msra.mxu0 0.0
    %380 = vmatpush.xpose.msra.mxu0 %v363
    %381 = vmatmul.f32.gmra.mxu0 %v361
    %v382 = vpop.f32.mrf.mxu0
    %v383 = vadd.f32 0.0, %v382
    %384 = vdwg.mxu0
    %v385 = vmul.f32 %v383, 0.35355338
    %v386 = vsel %vm359, %v385, -inf
    %387 = vmax.xlane.f32.xlu0 %v386
    %v388 = vpop.xlane.xlu0 %387
    %v389 = vsub.f32 %v385, %v388
    %v390 = vmul.f32 %v389, 1.442695
    %v391 = vpow.pop %v390
    %v392 = vsel %vm359, %v391, 0.0
    %393 = vadd.xlane.f32.xlu0 %v392
    %v394 = vpop.xlane.xlu0 %393
    %v395 = vrcp.pop %v394
    %v396 = vmul.f32 %v391, %v395
    %398 = vrot.lane.b32.xlu0 %v299, 32
    %v399 = vpop.permute.xlu0 %398
    %v402 = vsel %vm359, %v396, 0
    %404 = vmatpush.msra.mxu0 0.0
    %405 = vmatpush.msra.mxu0 0.0
    %406 = vmatpush.msra.mxu0 0.0
    %407 = vmatpush.msra.mxu0 0.0
    %408 = vmatpush.msra.mxu0 0.0
    %409 = vmatpush.msra.mxu0 0.0
    %410 = vmatpush.msra.mxu0 0.0
    %411 = vmatpush.msra.mxu0 0.0
    %412 = vmatpush.msra.mxu0 0.0
    %413 = vmatpush.msra.mxu0 0.0
    %414 = vmatpush.msra.mxu0 0.0
    %415 = vmatpush.msra.mxu0 0.0
    %416 = vmatpush.msra.mxu0 0.0
    %417 = vmatpush.msra.mxu0 0.0
    %418 = vmatpush.msra.mxu0 0.0
    %419 = vmatpush.msra.mxu0 %v399
    %420 = vmatmul.f32.gmra.mxu0 %v402
    %v421 = vpop.f32.mrf.mxu0
    %v422 = vadd.f32 0.0, %v421
    %423 = vdwg.mxu0
    %424 = vrot.lane.b32.xlu0 %v324, 120
    %v425 = vpop.permute.xlu0 %424
    %v426 = vsel %vm359, %v425, 0
    %428 = vmatpush.xpose.msra.mxu0 0.0
    %429 = vmatpush.xpose.msra.mxu0 0.0
    %430 = vmatpush.xpose.msra.mxu0 0.0
    %431 = vmatpush.xpose.msra.mxu0 0.0
    %432 = vmatpush.xpose.msra.mxu0 0.0
    %433 = vmatpush.xpose.msra.mxu0 0.0
    %434 = vmatpush.xpose.msra.mxu0 0.0
    %435 = vmatpush.xpose.msra.mxu0 0.0
    %436 = vmatpush.xpose.msra.mxu0 0.0
    %437 = vmatpush.xpose.msra.mxu0 0.0
    %438 = vmatpush.xpose.msra.mxu0 0.0
    %439 = vmatpush.xpose.msra.mxu0 0.0
    %440 = vmatpush.xpose.msra.mxu0 0.0
    %441 = vmatpush.xpose.msra.mxu0 0.0
    %442 = vmatpush.xpose.msra.mxu0 0.0
    %443 = vmatpush.xpose.msra.mxu0 %v363
    %444 = vmatmul.f32.gmra.mxu0 %v426
    %v445 = vpop.f32.mrf.mxu0
    %v446 = vadd.f32 0.0, %v445
    %447 = vdwg.mxu0
    %v448 = vmul.f32 %v446, 0.35355338
    %v449 = vsel %vm359, %v448, -inf
    %450 = vmax.xlane.f32.xlu0 %v449
    %v451 = vpop.xlane.xlu0 %450
    %v452 = vsub.f32 %v448, %v451
    %v453 = vmul.f32 %v452, 1.442695
    %v454 = vpow.pop %v453
    %v455 = vsel %vm359, %v454, 0.0
    %456 = vadd.xlane.f32.xlu0 %v455
    %v457 = vpop.xlane.xlu0 %456
    %v458 = vrcp.pop %v457
    %v459 = vmul.f32 %v454, %v458
    %v461 = vsel %vm359, %v459, 0
    %463 = vmatpush.msra.mxu0 0.0
    %464 = vmatpush.msra.mxu0 0.0
    %465 = vmatpush.msra.mxu0 0.0
    %466 = vmatpush.msra.mxu0 0.0
    %467 = vmatpush.msra.mxu0 0.0
    %468 = vmatpush.msra.mxu0 0.0
    %469 = vmatpush.msra.mxu0 0.0
    %470 = vmatpush.msra.mxu0 0.0
    %471 = vmatpush.msra.mxu0 0.0
    %472 = vmatpush.msra.mxu0 0.0
    %473 = vmatpush.msra.mxu0 0.0
    %474 = vmatpush.msra.mxu0 0.0
    %475 = vmatpush.msra.mxu0 0.0
    %476 = vmatpush.msra.mxu0 0.0
    %477 = vmatpush.msra.mxu0 0.0
    %478 = vmatpush.msra.mxu0 %v399
    %479 = vmatmul.f32.gmra.mxu0 %v461
    %v480 = vpop.f32.mrf.mxu0
    %v481 = vadd.f32 0.0, %v480
    %482 = vdwg.mxu0
    %483 = vrot.lane.b32.xlu0 %v324, 112
    %v484 = vpop.permute.xlu0 %483
    %485 = vrot.lane.b32.xlu0 %v354, 56
    %v486 = vpop.permute.xlu0 %485
    %v487 = vsel %vm359, %v484, 0
    %v489 = vsel %vm359, %v486, 0
    %491 = vmatpush.xpose.msra.mxu0 0.0
    %492 = vmatpush.xpose.msra.mxu0 0.0
    %493 = vmatpush.xpose.msra.mxu0 0.0
    %494 = vmatpush.xpose.msra.mxu0 0.0
    %495 = vmatpush.xpose.msra.mxu0 0.0
    %496 = vmatpush.xpose.msra.mxu0 0.0
    %497 = vmatpush.xpose.msra.mxu0 0.0
    %498 = vmatpush.xpose.msra.mxu0 0.0
    %499 = vmatpush.xpose.msra.mxu0 0.0
    %500 = vmatpush.xpose.msra.mxu0 0.0
    %501 = vmatpush.xpose.msra.mxu0 0.0
    %502 = vmatpush.xpose.msra.mxu0 0.0
    %503 = vmatpush.xpose.msra.mxu0 0.0
    %504 = vmatpush.xpose.msra.mxu0 0.0
    %505 = vmatpush.xpose.msra.mxu0 0.0
    %506 = vmatpush.xpose.msra.mxu0 %v489
    %507 = vmatmul.f32.gmra.mxu0 %v487
    %v508 = vpop.f32.mrf.mxu0
    %v509 = vadd.f32 0.0, %v508
    %510 = vdwg.mxu0
    %v511 = vmul.f32 %v509, 0.35355338
    %v512 = vsel %vm359, %v511, -inf
    %513 = vmax.xlane.f32.xlu0 %v512
    %v514 = vpop.xlane.xlu0 %513
    %v515 = vsub.f32 %v511, %v514
    %v516 = vmul.f32 %v515, 1.442695
    %v517 = vpow.pop %v516
    %v518 = vsel %vm359, %v517, 0.0
    %519 = vadd.xlane.f32.xlu0 %v518
    %v520 = vpop.xlane.xlu0 %519
    %v521 = vrcp.pop %v520
    %v522 = vmul.f32 %v517, %v521
    %523 = vrot.lane.b32.xlu0 %v299, 24
    %v524 = vpop.permute.xlu0 %523
    %v527 = vsel %vm359, %v522, 0
    %529 = vmatpush.msra.mxu0 0.0
    %530 = vmatpush.msra.mxu0 0.0
    %531 = vmatpush.msra.mxu0 0.0
    %532 = vmatpush.msra.mxu0 0.0
    %533 = vmatpush.msra.mxu0 0.0
    %534 = vmatpush.msra.mxu0 0.0
    %535 = vmatpush.msra.mxu0 0.0
    %536 = vmatpush.msra.mxu0 0.0
    %537 = vmatpush.msra.mxu0 0.0
    %538 = vmatpush.msra.mxu0 0.0
    %539 = vmatpush.msra.mxu0 0.0
    %540 = vmatpush.msra.mxu0 0.0
    %541 = vmatpush.msra.mxu0 0.0
    %542 = vmatpush.msra.mxu0 0.0
    %543 = vmatpush.msra.mxu0 0.0
    %544 = vmatpush.msra.mxu0 %v524
    %545 = vmatmul.f32.gmra.mxu0 %v527
    %v546 = vpop.f32.mrf.mxu0
    %v547 = vadd.f32 0.0, %v546
    %548 = vdwg.mxu0
    %549 = vrot.lane.b32.xlu0 %v324, 104
    %v550 = vpop.permute.xlu0 %549
    %v551 = vsel %vm359, %v550, 0
    %553 = vmatpush.xpose.msra.mxu0 0.0
    %554 = vmatpush.xpose.msra.mxu0 0.0
    %555 = vmatpush.xpose.msra.mxu0 0.0
    %556 = vmatpush.xpose.msra.mxu0 0.0
    %557 = vmatpush.xpose.msra.mxu0 0.0
    %558 = vmatpush.xpose.msra.mxu0 0.0
    %559 = vmatpush.xpose.msra.mxu0 0.0
    %560 = vmatpush.xpose.msra.mxu0 0.0
    %561 = vmatpush.xpose.msra.mxu0 0.0
    %562 = vmatpush.xpose.msra.mxu0 0.0
    %563 = vmatpush.xpose.msra.mxu0 0.0
    %564 = vmatpush.xpose.msra.mxu0 0.0
    %565 = vmatpush.xpose.msra.mxu0 0.0
    %566 = vmatpush.xpose.msra.mxu0 0.0
    %567 = vmatpush.xpose.msra.mxu0 0.0
    %568 = vmatpush.xpose.msra.mxu0 %v489
    %569 = vmatmul.f32.gmra.mxu0 %v551
    %v570 = vpop.f32.mrf.mxu0
    %v571 = vadd.f32 0.0, %v570
    %572 = vdwg.mxu0
    %v573 = vmul.f32 %v571, 0.35355338
    %v574 = vsel %vm359, %v573, -inf
    %575 = vmax.xlane.f32.xlu0 %v574
    %v576 = vpop.xlane.xlu0 %575
    %v577 = vsub.f32 %v573, %v576
    %v578 = vmul.f32 %v577, 1.442695
    %v579 = vpow.pop %v578
    %v580 = vsel %vm359, %v579, 0.0
    %581 = vadd.xlane.f32.xlu0 %v580
    %v582 = vpop.xlane.xlu0 %581
    %v583 = vrcp.pop %v582
    %v584 = vmul.f32 %v579, %v583
    %v586 = vsel %vm359, %v584, 0
    %588 = vmatpush.msra.mxu0 0.0
    %589 = vmatpush.msra.mxu0 0.0
    %590 = vmatpush.msra.mxu0 0.0
    %591 = vmatpush.msra.mxu0 0.0
    %592 = vmatpush.msra.mxu0 0.0
    %593 = vmatpush.msra.mxu0 0.0
    %594 = vmatpush.msra.mxu0 0.0
    %595 = vmatpush.msra.mxu0 0.0
    %596 = vmatpush.msra.mxu0 0.0
    %597 = vmatpush.msra.mxu0 0.0
    %598 = vmatpush.msra.mxu0 0.0
    %599 = vmatpush.msra.mxu0 0.0
    %600 = vmatpush.msra.mxu0 0.0
    %601 = vmatpush.msra.mxu0 0.0
    %602 = vmatpush.msra.mxu0 0.0
    %603 = vmatpush.msra.mxu0 %v524
    %604 = vmatmul.f32.gmra.mxu0 %v586
    %v605 = vpop.f32.mrf.mxu0
    %v606 = vadd.f32 0.0, %v605
    %607 = vdwg.mxu0
    %609 = vrot.lane.b32.xlu0 %v481, 8
    %v610 = vpop.permute.xlu0 %609
    %613 = vrot.lane.b32.xlu0 %v547, 16
    %v614 = vpop.permute.xlu0 %613
    %617 = vrot.lane.b32.xlu0 %v606, 24
    %v618 = vpop.permute.xlu0 %617
    %v620 = vsel %vm359, %v422, %v610
    %v621 = vsel %vm185, %v620, %v614
    %vm622 = vcmask 195584
    %v623 = vsel %vm622, %v621, %v618
    %625 = vrot.lane.b32.xlu0 %v355, 64
    %v626 = vpop.permute.xlu0 %625
    %v628 = vsel %vm359, %v325, 0
    %v630 = vsel %vm359, %v626, 0
    %632 = vmatpush.xpose.msra.mxu0 0.0
    %633 = vmatpush.xpose.msra.mxu0 0.0
    %634 = vmatpush.xpose.msra.mxu0 0.0
    %635 = vmatpush.xpose.msra.mxu0 0.0
    %636 = vmatpush.xpose.msra.mxu0 0.0
    %637 = vmatpush.xpose.msra.mxu0 0.0
    %638 = vmatpush.xpose.msra.mxu0 0.0
    %639 = vmatpush.xpose.msra.mxu0 0.0
    %640 = vmatpush.xpose.msra.mxu0 0.0
    %641 = vmatpush.xpose.msra.mxu0 0.0
    %642 = vmatpush.xpose.msra.mxu0 0.0
    %643 = vmatpush.xpose.msra.mxu0 0.0
    %644 = vmatpush.xpose.msra.mxu0 0.0
    %645 = vmatpush.xpose.msra.mxu0 0.0
    %646 = vmatpush.xpose.msra.mxu0 0.0
    %647 = vmatpush.xpose.msra.mxu0 %v630
    %648 = vmatmul.f32.gmra.mxu0 %v628
    %v649 = vpop.f32.mrf.mxu0
    %v650 = vadd.f32 0.0, %v649
    %651 = vdwg.mxu0
    %v652 = vmul.f32 %v650, 0.35355338
    %v653 = vsel %vm359, %v652, -inf
    %654 = vmax.xlane.f32.xlu0 %v653
    %v655 = vpop.xlane.xlu0 %654
    %v656 = vsub.f32 %v652, %v655
    %v657 = vmul.f32 %v656, 1.442695
    %v658 = vpow.pop %v657
    %v659 = vsel %vm359, %v658, 0.0
    %660 = vadd.xlane.f32.xlu0 %v659
    %v661 = vpop.xlane.xlu0 %660
    %v662 = vrcp.pop %v661
    %v663 = vmul.f32 %v658, %v662
    %665 = vrot.lane.b32.xlu0 %v302, 32
    %v666 = vpop.permute.xlu0 %665
    %v669 = vsel %vm359, %v663, 0
    %671 = vmatpush.msra.mxu0 0.0
    %672 = vmatpush.msra.mxu0 0.0
    %673 = vmatpush.msra.mxu0 0.0
    %674 = vmatpush.msra.mxu0 0.0
    %675 = vmatpush.msra.mxu0 0.0
    %676 = vmatpush.msra.mxu0 0.0
    %677 = vmatpush.msra.mxu0 0.0
    %678 = vmatpush.msra.mxu0 0.0
    %679 = vmatpush.msra.mxu0 0.0
    %680 = vmatpush.msra.mxu0 0.0
    %681 = vmatpush.msra.mxu0 0.0
    %682 = vmatpush.msra.mxu0 0.0
    %683 = vmatpush.msra.mxu0 0.0
    %684 = vmatpush.msra.mxu0 0.0
    %685 = vmatpush.msra.mxu0 0.0
    %686 = vmatpush.msra.mxu0 %v666
    %687 = vmatmul.f32.gmra.mxu0 %v669
    %v688 = vpop.f32.mrf.mxu0
    %v689 = vadd.f32 0.0, %v688
    %690 = vdwg.mxu0
    %691 = vrot.lane.b32.xlu0 %v325, 120
    %v692 = vpop.permute.xlu0 %691
    %v693 = vsel %vm359, %v692, 0
    %695 = vmatpush.xpose.msra.mxu0 0.0
    %696 = vmatpush.xpose.msra.mxu0 0.0
    %697 = vmatpush.xpose.msra.mxu0 0.0
    %698 = vmatpush.xpose.msra.mxu0 0.0
    %699 = vmatpush.xpose.msra.mxu0 0.0
    %700 = vmatpush.xpose.msra.mxu0 0.0
    %701 = vmatpush.xpose.msra.mxu0 0.0
    %702 = vmatpush.xpose.msra.mxu0 0.0
    %703 = vmatpush.xpose.msra.mxu0 0.0
    %704 = vmatpush.xpose.msra.mxu0 0.0
    %705 = vmatpush.xpose.msra.mxu0 0.0
    %706 = vmatpush.xpose.msra.mxu0 0.0
    %707 = vmatpush.xpose.msra.mxu0 0.0
    %708 = vmatpush.xpose.msra.mxu0 0.0
    %709 = vmatpush.xpose.msra.mxu0 0.0
    %710 = vmatpush.xpose.msra.mxu0 %v630
    %711 = vmatmul.f32.gmra.mxu0 %v693
    %v712 = vpop.f32.mrf.mxu0
    %v713 = vadd.f32 0.0, %v712
    %714 = vdwg.mxu0
    %v715 = vmul.f32 %v713, 0.35355338
    %v716 = vsel %vm359, %v715, -inf
    %717 = vmax.xlane.f32.xlu0 %v716
    %v718 = vpop.xlane.xlu0 %717
    %v719 = vsub.f32 %v715, %v718
    %v720 = vmul.f32 %v719, 1.442695
    %v721 = vpow.pop %v720
    %v722 = vsel %vm359, %v721, 0.0
    %723 = vadd.xlane.f32.xlu0 %v722
    %v724 = vpop.xlane.xlu0 %723
    %v725 = vrcp.pop %v724
    %v726 = vmul.f32 %v721, %v725
    %v728 = vsel %vm359, %v726, 0
    %730 = vmatpush.msra.mxu0 0.0
    %731 = vmatpush.msra.mxu0 0.0
    %732 = vmatpush.msra.mxu0 0.0
    %733 = vmatpush.msra.mxu0 0.0
    %734 = vmatpush.msra.mxu0 0.0
    %735 = vmatpush.msra.mxu0 0.0
    %736 = vmatpush.msra.mxu0 0.0
    %737 = vmatpush.msra.mxu0 0.0
    %738 = vmatpush.msra.mxu0 0.0
    %739 = vmatpush.msra.mxu0 0.0
    %740 = vmatpush.msra.mxu0 0.0
    %741 = vmatpush.msra.mxu0 0.0
    %742 = vmatpush.msra.mxu0 0.0
    %743 = vmatpush.msra.mxu0 0.0
    %744 = vmatpush.msra.mxu0 0.0
    %745 = vmatpush.msra.mxu0 %v666
    %746 = vmatmul.f32.gmra.mxu0 %v728
    %v747 = vpop.f32.mrf.mxu0
    %v748 = vadd.f32 0.0, %v747
    %749 = vdwg.mxu0
    %750 = vrot.lane.b32.xlu0 %v325, 112
    %v751 = vpop.permute.xlu0 %750
    %752 = vrot.lane.b32.xlu0 %v355, 56
    %v753 = vpop.permute.xlu0 %752
    %v754 = vsel %vm359, %v751, 0
    %v756 = vsel %vm359, %v753, 0
    %758 = vmatpush.xpose.msra.mxu0 0.0
    %759 = vmatpush.xpose.msra.mxu0 0.0
    %760 = vmatpush.xpose.msra.mxu0 0.0
    %761 = vmatpush.xpose.msra.mxu0 0.0
    %762 = vmatpush.xpose.msra.mxu0 0.0
    %763 = vmatpush.xpose.msra.mxu0 0.0
    %764 = vmatpush.xpose.msra.mxu0 0.0
    %765 = vmatpush.xpose.msra.mxu0 0.0
    %766 = vmatpush.xpose.msra.mxu0 0.0
    %767 = vmatpush.xpose.msra.mxu0 0.0
    %768 = vmatpush.xpose.msra.mxu0 0.0
    %769 = vmatpush.xpose.msra.mxu0 0.0
    %770 = vmatpush.xpose.msra.mxu0 0.0
    %771 = vmatpush.xpose.msra.mxu0 0.0
    %772 = vmatpush.xpose.msra.mxu0 0.0
    %773 = vmatpush.xpose.msra.mxu0 %v756
    %774 = vmatmul.f32.gmra.mxu0 %v754
    %v775 = vpop.f32.mrf.mxu0
    %v776 = vadd.f32 0.0, %v775
    %777 = vdwg.mxu0
    %v778 = vmul.f32 %v776, 0.35355338
    %v779 = vsel %vm359, %v778, -inf
    %780 = vmax.xlane.f32.xlu0 %v779
    %v781 = vpop.xlane.xlu0 %780
    %v782 = vsub.f32 %v778, %v781
    %v783 = vmul.f32 %v782, 1.442695
    %v784 = vpow.pop %v783
    %v785 = vsel %vm359, %v784, 0.0
    %786 = vadd.xlane.f32.xlu0 %v785
    %v787 = vpop.xlane.xlu0 %786
    %v788 = vrcp.pop %v787
    %v789 = vmul.f32 %v784, %v788
    %790 = vrot.lane.b32.xlu0 %v302, 24
    %v791 = vpop.permute.xlu0 %790
    %v794 = vsel %vm359, %v789, 0
    %796 = vmatpush.msra.mxu0 0.0
    %797 = vmatpush.msra.mxu0 0.0
    %798 = vmatpush.msra.mxu0 0.0
    %799 = vmatpush.msra.mxu0 0.0
    %800 = vmatpush.msra.mxu0 0.0
    %801 = vmatpush.msra.mxu0 0.0
    %802 = vmatpush.msra.mxu0 0.0
    %803 = vmatpush.msra.mxu0 0.0
    %804 = vmatpush.msra.mxu0 0.0
    %805 = vmatpush.msra.mxu0 0.0
    %806 = vmatpush.msra.mxu0 0.0
    %807 = vmatpush.msra.mxu0 0.0
    %808 = vmatpush.msra.mxu0 0.0
    %809 = vmatpush.msra.mxu0 0.0
    %810 = vmatpush.msra.mxu0 0.0
    %811 = vmatpush.msra.mxu0 %v791
    %812 = vmatmul.f32.gmra.mxu0 %v794
    %v813 = vpop.f32.mrf.mxu0
    %v814 = vadd.f32 0.0, %v813
    %815 = vdwg.mxu0
    %816 = vrot.lane.b32.xlu0 %v325, 104
    %v817 = vpop.permute.xlu0 %816
    %v818 = vsel %vm359, %v817, 0
    %820 = vmatpush.xpose.msra.mxu0 0.0
    %821 = vmatpush.xpose.msra.mxu0 0.0
    %822 = vmatpush.xpose.msra.mxu0 0.0
    %823 = vmatpush.xpose.msra.mxu0 0.0
    %824 = vmatpush.xpose.msra.mxu0 0.0
    %825 = vmatpush.xpose.msra.mxu0 0.0
    %826 = vmatpush.xpose.msra.mxu0 0.0
    %827 = vmatpush.xpose.msra.mxu0 0.0
    %828 = vmatpush.xpose.msra.mxu0 0.0
    %829 = vmatpush.xpose.msra.mxu0 0.0
    %830 = vmatpush.xpose.msra.mxu0 0.0
    %831 = vmatpush.xpose.msra.mxu0 0.0
    %832 = vmatpush.xpose.msra.mxu0 0.0
    %833 = vmatpush.xpose.msra.mxu0 0.0
    %834 = vmatpush.xpose.msra.mxu0 0.0
    %835 = vmatpush.xpose.msra.mxu0 %v756
    %836 = vmatmul.f32.gmra.mxu0 %v818
    %v837 = vpop.f32.mrf.mxu0
    %v838 = vadd.f32 0.0, %v837
    %839 = vdwg.mxu0
    %v840 = vmul.f32 %v838, 0.35355338
    %v841 = vsel %vm359, %v840, -inf
    %842 = vmax.xlane.f32.xlu0 %v841
    %v843 = vpop.xlane.xlu0 %842
    %v844 = vsub.f32 %v840, %v843
    %v845 = vmul.f32 %v844, 1.442695
    %v846 = vpow.pop %v845
    %v847 = vsel %vm359, %v846, 0.0
    %848 = vadd.xlane.f32.xlu0 %v847
    %v849 = vpop.xlane.xlu0 %848
    %v850 = vrcp.pop %v849
    %v851 = vmul.f32 %v846, %v850
    %v853 = vsel %vm359, %v851, 0
    %855 = vmatpush.msra.mxu0 0.0
    %856 = vmatpush.msra.mxu0 0.0
    %857 = vmatpush.msra.mxu0 0.0
    %858 = vmatpush.msra.mxu0 0.0
    %859 = vmatpush.msra.mxu0 0.0
    %860 = vmatpush.msra.mxu0 0.0
    %861 = vmatpush.msra.mxu0 0.0
    %862 = vmatpush.msra.mxu0 0.0
    %863 = vmatpush.msra.mxu0 0.0
    %864 = vmatpush.msra.mxu0 0.0
    %865 = vmatpush.msra.mxu0 0.0
    %866 = vmatpush.msra.mxu0 0.0
    %867 = vmatpush.msra.mxu0 0.0
    %868 = vmatpush.msra.mxu0 0.0
    %869 = vmatpush.msra.mxu0 0.0
    %870 = vmatpush.msra.mxu0 %v791
    %871 = vmatmul.f32.gmra.mxu0 %v853
    %v872 = vpop.f32.mrf.mxu0
    %v873 = vadd.f32 0.0, %v872
    %874 = vdwg.mxu0
    %876 = vrot.lane.b32.xlu0 %v748, 8
    %v877 = vpop.permute.xlu0 %876
    %880 = vrot.lane.b32.xlu0 %v814, 16
    %v881 = vpop.permute.xlu0 %880
    %884 = vrot.lane.b32.xlu0 %v873, 24
    %v885 = vpop.permute.xlu0 %884
    %v887 = vsel %vm359, %v689, %v877
    %v888 = vsel %vm185, %v887, %v881
    %v889 = vsel %vm622, %v888, %v885
    %v890 = vld [vmem:[%s9] sm:$0xff]
    %v891 = vld [vmem:[%s9 + $0x8] sm:$0xff]
    %v892 = vld [vmem:[%s9 + $0x10] sm:$0xff]
    %v893 = vld [vmem:[%s9 + $0x18] sm:$0xff]
    %v895 = vsel %vm226, %v623, 0
    %v898 = vsel %vm226, %v889, 0
    %900 = vmatpush.msra.mxu0 0.0
    %901 = vmatpush.msra.mxu0 0.0
    %902 = vmatpush.msra.mxu0 0.0
    %903 = vmatpush.msra.mxu0 0.0
    %904 = vmatpush.msra.mxu0 0.0
    %905 = vmatpush.msra.mxu0 0.0
    %906 = vmatpush.msra.mxu0 0.0
    %907 = vmatpush.msra.mxu0 0.0
    %908 = vmatpush.msra.mxu0 0.0
    %909 = vmatpush.msra.mxu0 0.0
    %910 = vmatpush.msra.mxu0 0.0
    %911 = vmatpush.msra.mxu0 0.0
    %912 = vmatpush.msra.mxu0 %v893
    %913 = vmatpush.msra.mxu0 %v892
    %914 = vmatpush.msra.mxu0 %v891
    %915 = vmatpush.msra.mxu0 %v890
    %916 = vmatmul.f32.gmra.mxu0 %v895
    %v917 = vpop.f32.mrf.mxu0
    %v918 = vadd.f32 0.0, %v917
    %919 = vmatmul.f32.gmra.mxu0 %v898
    %v920 = vpop.f32.mrf.mxu0
    %v921 = vadd.f32 0.0, %v920
    %922 = vdwg.mxu0
    %v923 = vadd.f32 %v210, %v918
    %v924 = vadd.f32 %v213, %v921
    %v925 = vld [vmem:[%s10] sm:$0x1]
    %v926 = vmul.f32 %v923, %v923
    %v927 = vmul.f32 %v924, %v924
    %v928 = vsel %vm226, %v926, 0.0
    %929 = vadd.xlane.f32.xlu0 %v928
    %v930 = vpop.xlane.xlu0 %929
    %v931 = vsel %vm226, %v927, 0.0
    %932 = vadd.xlane.f32.xlu0 %v931
    %v933 = vpop.xlane.xlu0 %932
    %v934 = vmul.f32 %v930, %v239
    %v935 = vmul.f32 %v933, %v239
    %v936 = vadd.f32 %v934, 1e-05
    %v937 = vadd.f32 %v935, 1e-05
    %v938 = vrsqrt.pop %v936
    %v939 = vmul.f32 %v938, %v936
    %v940 = vmul.f32 %v939, %v938
    %v941 = vmul.f32 0.5, %v940
    %v942 = vsub.f32 1.5, %v941
    %v943 = vmul.f32 %v938, %v942
    %vm944 = vweird.f32 %v936
    %vm945 = vweird.f32 %v938
    %vm946 = vmor %vm944, %vm945
    %v947 = vsel %vm946, %v938, %v943
    %v948 = vrsqrt.pop %v937
    %v949 = vmul.f32 %v948, %v937
    %v950 = vmul.f32 %v949, %v948
    %v951 = vmul.f32 0.5, %v950
    %v952 = vsub.f32 1.5, %v951
    %v953 = vmul.f32 %v948, %v952
    %vm954 = vweird.f32 %v937
    %vm955 = vweird.f32 %v948
    %vm956 = vmor %vm954, %vm955
    %v957 = vsel %vm956, %v948, %v953
    %v958 = vmul.f32 %v923, %v947
    %v959 = vmul.f32 %v924, %v957
    %v961 = vperm.slane %v925, 0
    %v963 = vmul.f32 %v958, %v961
    %v964 = vmul.f32 %v959, %v961
    %v965 = vld [vmem:[%s11] sm:$0xff]
    %v966 = vld [vmem:[%s11 + $0x8] sm:$0xff]
    %v967 = vld [vmem:[%s11 + $0x10] sm:$0xff]
    %v968 = vld [vmem:[%s11 + $0x18] sm:$0xff]
    %v970 = vsel %vm226, %v963, 0
    %v973 = vsel %vm226, %v964, 0
    %975 = vmatpush.msra.mxu0 0.0
    %976 = vmatpush.msra.mxu0 0.0
    %977 = vmatpush.msra.mxu0 0.0
    %978 = vmatpush.msra.mxu0 0.0
    %979 = vmatpush.msra.mxu0 0.0
    %980 = vmatpush.msra.mxu0 0.0
    %981 = vmatpush.msra.mxu0 0.0
    %982 = vmatpush.msra.mxu0 0.0
    %983 = vmatpush.msra.mxu0 0.0
    %984 = vmatpush.msra.mxu0 0.0
    %985 = vmatpush.msra.mxu0 0.0
    %986 = vmatpush.msra.mxu0 0.0
    %987 = vmatpush.msra.mxu0 %v968
    %988 = vmatpush.msra.mxu0 %v967
    %989 = vmatpush.msra.mxu0 %v966
    %990 = vmatpush.msra.mxu0 %v965
    %991 = vmatmul.f32.gmra.mxu0 %v970
    %v992 = vpop.f32.mrf.mxu0
    %v993 = vadd.f32 0.0, %v992
    %994 = vmatmul.f32.gmra.mxu0 %v973
    %v995 = vpop.f32.mrf.mxu0
    %v996 = vadd.f32 0.0, %v995
    %997 = vdwg.mxu0
    %v998 = vxor.u32 %v993, 2147483648
    %v999 = vxor.u32 %v996, 2147483648
    %v1000 = vmul.f32 %v998, 1.442695
    %v1001 = vpow.pop %v1000
    %v1002 = vmul.f32 %v999, 1.442695
    %v1003 = vpow.pop %v1002
    %v1004 = vadd.f32 %v1001, 1.0
    %v1005 = vadd.f32 %v1003, 1.0
    %v1006 = vrcp.pop %v1004
    %v1007 = vmul.f32 %v1004, %v1006
    %v1008 = vsub.f32 1.0, %v1007
    %v1009 = vmul.f32 %v1006, %v1008
    %v1010 = vadd.f32 %v1006, %v1009
    %vm1011 = vweird.f32 %v1004
    %vm1012 = vweird.f32 %v1006
    %vm1013 = vmor %vm1011, %vm1012
    %v1014 = vsel %vm1013, %v1006, %v1010
    %v1015 = vand.u32 2147483647, %v1004
    %vm1016 = vcmp.eq.f32.partialorder %v1015, 8.507059e+37
    %v1017 = vand.u32 %v1004, 2147483648
    %v1018 = vor.u32 1.1754944e-38, %v1017
    %v1019 = vsel %vm1016, %v1018, %v1014
    %v1020 = vmul.f32 1.0, %v1019
    %v1021 = vrcp.pop %v1005
    %v1022 = vmul.f32 %v1005, %v1021
    %v1023 = vsub.f32 1.0, %v1022
    %v1024 = vmul.f32 %v1021, %v1023
    %v1025 = vadd.f32 %v1021, %v1024
    %vm1026 = vweird.f32 %v1005
    %vm1027 = vweird.f32 %v1021
    %vm1028 = vmor %vm1026, %vm1027
    %v1029 = vsel %vm1028, %v1021, %v1025
    %v1030 = vand.u32 2147483647, %v1005
    %vm1031 = vcmp.eq.f32.partialorder %v1030, 8.507059e+37
    %v1032 = vand.u32 %v1005, 2147483648
    %v1033 = vor.u32 1.1754944e-38, %v1032
    %v1034 = vsel %vm1031, %v1033, %v1029
    %v1035 = vmul.f32 1.0, %v1034
    %v1036 = vmul.f32 %v993, %v1020
    %v1037 = vmul.f32 %v996, %v1035
    %1040 = vrot.lane.b32.xlu0 %v993, 64
    %v1041 = vpop.permute.xlu0 %1040
    %1042 = vrot.lane.b32.xlu0 %v996, 64
    %v1043 = vpop.permute.xlu0 %1042
    %v1046 = vmul.f32 %v1036, %v1041
    %v1047 = vmul.f32 %v1037, %v1043
    %v1048 = vld [vmem:[%s12] sm:$0xff]
    %v1049 = vld [vmem:[%s12 + $0x8] sm:$0xff]
    %v1050 = vld [vmem:[%s12 + $0x10] sm:$0xff]
    %v1051 = vld [vmem:[%s12 + $0x18] sm:$0xff]
    %v1052 = vld [vmem:[%s12 + $0x20] sm:$0xff]
    %v1053 = vld [vmem:[%s12 + $0x28] sm:$0xff]
    %v1054 = vld [vmem:[%s12 + $0x30] sm:$0xff]
    %v1055 = vld [vmem:[%s12 + $0x38] sm:$0xff]
    %vm1056 = vcmask 523264
    %v1058 = vsel %vm1056, %v1046, 0
    %v1061 = vsel %vm1056, %v1047, 0
    %1063 = vmatpush.msra.mxu0 0.0
    %1064 = vmatpush.msra.mxu0 0.0
    %1065 = vmatpush.msra.mxu0 0.0
    %1066 = vmatpush.msra.mxu0 0.0
    %1067 = vmatpush.msra.mxu0 0.0
    %1068 = vmatpush.msra.mxu0 0.0
    %1069 = vmatpush.msra.mxu0 0.0
    %1070 = vmatpush.msra.mxu0 0.0
    %1071 = vmatpush.msra.mxu0 %v1055
    %1072 = vmatpush.msra.mxu0 %v1054
    %1073 = vmatpush.msra.mxu0 %v1053
    %1074 = vmatpush.msra.mxu0 %v1052
    %1075 = vmatpush.msra.mxu0 %v1051
    %1076 = vmatpush.msra.mxu0 %v1050
    %1077 = vmatpush.msra.mxu0 %v1049
    %1078 = vmatpush.msra.mxu0 %v1048
    %1079 = vmatmul.f32.gmra.mxu0 %v1058
    %v1080 = vpop.f32.mrf.mxu0
    %v1081 = vadd.f32 0.0, %v1080
    %1082 = vmatmul.f32.gmra.mxu0 %v1061
    %v1083 = vpop.f32.mrf.mxu0
    %v1084 = vadd.f32 0.0, %v1083
    %1085 = vdwg.mxu0
    %v1086 = vadd.f32 %v923, %v1081
    %v1087 = vadd.f32 %v924, %v1084
    %s1088 = scalar_lea.vmem %s7, 1
    %v1089 = vld [vmem:[%s1088] sm:$0x1]
    %v1090 = vmul.f32 %v1086, %v1086
    %v1091 = vmul.f32 %v1087, %v1087
    %v1092 = vsel %vm226, %v1090, 0.0
    %1093 = vadd.xlane.f32.xlu0 %v1092
    %v1094 = vpop.xlane.xlu0 %1093
    %v1095 = vsel %vm226, %v1091, 0.0
    %1096 = vadd.xlane.f32.xlu0 %v1095
    %v1097 = vpop.xlane.xlu0 %1096
    %v1098 = vmul.f32 %v1094, %v239
    %v1099 = vmul.f32 %v1097, %v239
    %v1100 = vadd.f32 %v1098, 1e-05
    %v1101 = vadd.f32 %v1099, 1e-05
    %v1102 = vrsqrt.pop %v1100
    %v1103 = vmul.f32 %v1102, %v1100
    %v1104 = vmul.f32 %v1103, %v1102
    %v1105 = vmul.f32 0.5, %v1104
    %v1106 = vsub.f32 1.5, %v1105
    %v1107 = vmul.f32 %v1102, %v1106
    %vm1108 = vweird.f32 %v1100
    %vm1109 = vweird.f32 %v1102
    %vm1110 = vmor %vm1108, %vm1109
    %v1111 = vsel %vm1110, %v1102, %v1107
    %v1112 = vrsqrt.pop %v1101
    %v1113 = vmul.f32 %v1112, %v1101
    %v1114 = vmul.f32 %v1113, %v1112
    %v1115 = vmul.f32 0.5, %v1114
    %v1116 = vsub.f32 1.5, %v1115
    %v1117 = vmul.f32 %v1112, %v1116
    %vm1118 = vweird.f32 %v1101
    %vm1119 = vweird.f32 %v1112
    %vm1120 = vmor %vm1118, %vm1119
    %v1121 = vsel %vm1120, %v1112, %v1117
    %v1122 = vmul.f32 %v1086, %v1111
    %v1123 = vmul.f32 %v1087, %v1121
    %v1125 = vperm.slane %v1089, 0
    %v1127 = vmul.f32 %v1122, %v1125
    %v1128 = vmul.f32 %v1123, %v1125
    %s1129 = scalar_lea.vmem %s8, 32
    %v1130 = vld [vmem:[%s1129] sm:$0xff]
    %v1131 = vld [vmem:[%s1129 + $0x8] sm:$0xff]
    %v1132 = vld [vmem:[%s1129 + $0x10] sm:$0xff]
    %v1133 = vld [vmem:[%s1129 + $0x18] sm:$0xff]
    %v1135 = vsel %vm226, %v1127, 0
    %v1138 = vsel %vm226, %v1128, 0
    %1140 = vmatpush.msra.mxu0 0.0
    %1141 = vmatpush.msra.mxu0 0.0
    %1142 = vmatpush.msra.mxu0 0.0
    %1143 = vmatpush.msra.mxu0 0.0
    %1144 = vmatpush.msra.mxu0 0.0
    %1145 = vmatpush.msra.mxu0 0.0
    %1146 = vmatpush.msra.mxu0 0.0
    %1147 = vmatpush.msra.mxu0 0.0
    %1148 = vmatpush.msra.mxu0 0.0
    %1149 = vmatpush.msra.mxu0 0.0
    %1150 = vmatpush.msra.mxu0 0.0
    %1151 = vmatpush.msra.mxu0 0.0
    %1152 = vmatpush.msra.mxu0 %v1133
    %1153 = vmatpush.msra.mxu0 %v1132
    %1154 = vmatpush.msra.mxu0 %v1131
    %1155 = vmatpush.msra.mxu0 %v1130
    %1156 = vmatmul.f32.gmra.mxu0 %v1135
    %v1157 = vpop.f32.mrf.mxu0
    %v1158 = vadd.f32 0.0, %v1157
    %1159 = vmatmul.f32.gmra.mxu0 %v1138
    %v1160 = vpop.f32.mrf.mxu0
    %v1161 = vadd.f32 0.0, %v1160
    %1162 = vdwg.mxu0
    %v1163 = vmul.f32 %v1158, %v215
    %v1164 = vmul.f32 %v1161, %v216
    %v1165 = vmul.f32 %v1158, %v309
    %v1166 = vmul.f32 %v1161, %v311
    %1169 = vrot.lane.b32.xlu0 %v1165, 96
    %v1170 = vpop.permute.xlu0 %1169
    %1171 = vrot.lane.b32.xlu0 %v1166, 96
    %v1172 = vpop.permute.xlu0 %1171
    %v1175 = vadd.f32 %v1163, %v1170
    %v1176 = vadd.f32 %v1164, %v1172
    %v1177 = vmul.f32 %v1158, %v329
    %v1178 = vmul.f32 %v1161, %v331
    %v1179 = vmul.f32 %v1158, %v339
    %v1180 = vmul.f32 %v1161, %v341
    %1183 = vrot.lane.b32.xlu0 %v1179, 112
    %v1184 = vpop.permute.xlu0 %1183
    %1185 = vrot.lane.b32.xlu0 %v1180, 112
    %v1186 = vpop.permute.xlu0 %1185
    %v1189 = vadd.f32 %v1177, %v1184
    %v1190 = vadd.f32 %v1178, %v1186
    %1192 = vrot.lane.b32.xlu0 %v1189, 64
    %v1193 = vpop.permute.xlu0 %1192
    %v1195 = vsel %vm359, %v1175, 0
    %v1197 = vsel %vm359, %v1193, 0
    %1199 = vmatpush.xpose.msra.mxu0 0.0
    %1200 = vmatpush.xpose.msra.mxu0 0.0
    %1201 = vmatpush.xpose.msra.mxu0 0.0
    %1202 = vmatpush.xpose.msra.mxu0 0.0
    %1203 = vmatpush.xpose.msra.mxu0 0.0
    %1204 = vmatpush.xpose.msra.mxu0 0.0
    %1205 = vmatpush.xpose.msra.mxu0 0.0
    %1206 = vmatpush.xpose.msra.mxu0 0.0
    %1207 = vmatpush.xpose.msra.mxu0 0.0
    %1208 = vmatpush.xpose.msra.mxu0 0.0
    %1209 = vmatpush.xpose.msra.mxu0 0.0
    %1210 = vmatpush.xpose.msra.mxu0 0.0
    %1211 = vmatpush.xpose.msra.mxu0 0.0
    %1212 = vmatpush.xpose.msra.mxu0 0.0
    %1213 = vmatpush.xpose.msra.mxu0 0.0
    %1214 = vmatpush.xpose.msra.mxu0 %v1197
    %1215 = vmatmul.f32.gmra.mxu0 %v1195
    %v1216 = vpop.f32.mrf.mxu0
    %v1217 = vadd.f32 0.0, %v1216
    %1218 = vdwg.mxu0
    %v1219 = vmul.f32 %v1217, 0.35355338
    %v1220 = vsel %vm359, %v1219, -inf
    %1221 = vmax.xlane.f32.xlu0 %v1220
    %v1222 = vpop.xlane.xlu0 %1221
    %v1223 = vsub.f32 %v1219, %v1222
    %v1224 = vmul.f32 %v1223, 1.442695
    %v1225 = vpow.pop %v1224
    %v1226 = vsel %vm359, %v1225, 0.0
    %1227 = vadd.xlane.f32.xlu0 %v1226
    %v1228 = vpop.xlane.xlu0 %1227
    %v1229 = vrcp.pop %v1228
    %v1230 = vmul.f32 %v1225, %v1229
    %1232 = vrot.lane.b32.xlu0 %v1158, 32
    %v1233 = vpop.permute.xlu0 %1232
    %v1236 = vsel %vm359, %v1230, 0
    %1238 = vmatpush.msra.mxu0 0.0
    %1239 = vmatpush.msra.mxu0 0.0
    %1240 = vmatpush.msra.mxu0 0.0
    %1241 = vmatpush.msra.mxu0 0.0
    %1242 = vmatpush.msra.mxu0 0.0
    %1243 = vmatpush.msra.mxu0 0.0
    %1244 = vmatpush.msra.mxu0 0.0
    %1245 = vmatpush.msra.mxu0 0.0
    %1246 = vmatpush.msra.mxu0 0.0
    %1247 = vmatpush.msra.mxu0 0.0
    %1248 = vmatpush.msra.mxu0 0.0
    %1249 = vmatpush.msra.mxu0 0.0
    %1250 = vmatpush.msra.mxu0 0.0
    %1251 = vmatpush.msra.mxu0 0.0
    %1252 = vmatpush.msra.mxu0 0.0
    %1253 = vmatpush.msra.mxu0 %v1233
    %1254 = vmatmul.f32.gmra.mxu0 %v1236
    %v1255 = vpop.f32.mrf.mxu0
    %v1256 = vadd.f32 0.0, %v1255
    %1257 = vdwg.mxu0
    %1258 = vrot.lane.b32.xlu0 %v1175, 120
    %v1259 = vpop.permute.xlu0 %1258
    %v1260 = vsel %vm359, %v1259, 0
    %1262 = vmatpush.xpose.msra.mxu0 0.0
    %1263 = vmatpush.xpose.msra.mxu0 0.0
    %1264 = vmatpush.xpose.msra.mxu0 0.0
    %1265 = vmatpush.xpose.msra.mxu0 0.0
    %1266 = vmatpush.xpose.msra.mxu0 0.0
    %1267 = vmatpush.xpose.msra.mxu0 0.0
    %1268 = vmatpush.xpose.msra.mxu0 0.0
    %1269 = vmatpush.xpose.msra.mxu0 0.0
    %1270 = vmatpush.xpose.msra.mxu0 0.0
    %1271 = vmatpush.xpose.msra.mxu0 0.0
    %1272 = vmatpush.xpose.msra.mxu0 0.0
    %1273 = vmatpush.xpose.msra.mxu0 0.0
    %1274 = vmatpush.xpose.msra.mxu0 0.0
    %1275 = vmatpush.xpose.msra.mxu0 0.0
    %1276 = vmatpush.xpose.msra.mxu0 0.0
    %1277 = vmatpush.xpose.msra.mxu0 %v1197
    %1278 = vmatmul.f32.gmra.mxu0 %v1260
    %v1279 = vpop.f32.mrf.mxu0
    %v1280 = vadd.f32 0.0, %v1279
    %1281 = vdwg.mxu0
    %v1282 = vmul.f32 %v1280, 0.35355338
    %v1283 = vsel %vm359, %v1282, -inf
    %1284 = vmax.xlane.f32.xlu0 %v1283
    %v1285 = vpop.xlane.xlu0 %1284
    %v1286 = vsub.f32 %v1282, %v1285
    %v1287 = vmul.f32 %v1286, 1.442695
    %v1288 = vpow.pop %v1287
    %v1289 = vsel %vm359, %v1288, 0.0
    %1290 = vadd.xlane.f32.xlu0 %v1289
    %v1291 = vpop.xlane.xlu0 %1290
    %v1292 = vrcp.pop %v1291
    %v1293 = vmul.f32 %v1288, %v1292
    %v1295 = vsel %vm359, %v1293, 0
    %1297 = vmatpush.msra.mxu0 0.0
    %1298 = vmatpush.msra.mxu0 0.0
    %1299 = vmatpush.msra.mxu0 0.0
    %1300 = vmatpush.msra.mxu0 0.0
    %1301 = vmatpush.msra.mxu0 0.0
    %1302 = vmatpush.msra.mxu0 0.0
    %1303 = vmatpush.msra.mxu0 0.0
    %1304 = vmatpush.msra.mxu0 0.0
    %1305 = vmatpush.msra.mxu0 0.0
    %1306 = vmatpush.msra.mxu0 0.0
    %1307 = vmatpush.msra.mxu0 0.0
    %1308 = vmatpush.msra.mxu0 0.0
    %1309 = vmatpush.msra.mxu0 0.0
    %1310 = vmatpush.msra.mxu0 0.0
    %1311 = vmatpush.msra.mxu0 0.0
    %1312 = vmatpush.msra.mxu0 %v1233
    %1313 = vmatmul.f32.gmra.mxu0 %v1295
    %v1314 = vpop.f32.mrf.mxu0
    %v1315 = vadd.f32 0.0, %v1314
    %1316 = vdwg.mxu0
    %1317 = vrot.lane.b32.xlu0 %v1175, 112
    %v1318 = vpop.permute.xlu0 %1317
    %1319 = vrot.lane.b32.xlu0 %v1189, 56
    %v1320 = vpop.permute.xlu0 %1319
    %v1321 = vsel %vm359, %v1318, 0
    %v1323 = vsel %vm359, %v1320, 0
    %1325 = vmatpush.xpose.msra.mxu0 0.0
    %1326 = vmatpush.xpose.msra.mxu0 0.0
    %1327 = vmatpush.xpose.msra.mxu0 0.0
    %1328 = vmatpush.xpose.msra.mxu0 0.0
    %1329 = vmatpush.xpose.msra.mxu0 0.0
    %1330 = vmatpush.xpose.msra.mxu0 0.0
    %1331 = vmatpush.xpose.msra.mxu0 0.0
    %1332 = vmatpush.xpose.msra.mxu0 0.0
    %1333 = vmatpush.xpose.msra.mxu0 0.0
    %1334 = vmatpush.xpose.msra.mxu0 0.0
    %1335 = vmatpush.xpose.msra.mxu0 0.0
    %1336 = vmatpush.xpose.msra.mxu0 0.0
    %1337 = vmatpush.xpose.msra.mxu0 0.0
    %1338 = vmatpush.xpose.msra.mxu0 0.0
    %1339 = vmatpush.xpose.msra.mxu0 0.0
    %1340 = vmatpush.xpose.msra.mxu0 %v1323
    %1341 = vmatmul.f32.gmra.mxu0 %v1321
    %v1342 = vpop.f32.mrf.mxu0
    %v1343 = vadd.f32 0.0, %v1342
    %1344 = vdwg.mxu0
    %v1345 = vmul.f32 %v1343, 0.35355338
    %v1346 = vsel %vm359, %v1345, -inf
    %1347 = vmax.xlane.f32.xlu0 %v1346
    %v1348 = vpop.xlane.xlu0 %1347
    %v1349 = vsub.f32 %v1345, %v1348
    %v1350 = vmul.f32 %v1349, 1.442695
    %v1351 = vpow.pop %v1350
    %v1352 = vsel %vm359, %v1351, 0.0
    %1353 = vadd.xlane.f32.xlu0 %v1352
    %v1354 = vpop.xlane.xlu0 %1353
    %v1355 = vrcp.pop %v1354
    %v1356 = vmul.f32 %v1351, %v1355
    %1357 = vrot.lane.b32.xlu0 %v1158, 24
    %v1358 = vpop.permute.xlu0 %1357
    %v1361 = vsel %vm359, %v1356, 0
    %1363 = vmatpush.msra.mxu0 0.0
    %1364 = vmatpush.msra.mxu0 0.0
    %1365 = vmatpush.msra.mxu0 0.0
    %1366 = vmatpush.msra.mxu0 0.0
    %1367 = vmatpush.msra.mxu0 0.0
    %1368 = vmatpush.msra.mxu0 0.0
    %1369 = vmatpush.msra.mxu0 0.0
    %1370 = vmatpush.msra.mxu0 0.0
    %1371 = vmatpush.msra.mxu0 0.0
    %1372 = vmatpush.msra.mxu0 0.0
    %1373 = vmatpush.msra.mxu0 0.0
    %1374 = vmatpush.msra.mxu0 0.0
    %1375 = vmatpush.msra.mxu0 0.0
    %1376 = vmatpush.msra.mxu0 0.0
    %1377 = vmatpush.msra.mxu0 0.0
    %1378 = vmatpush.msra.mxu0 %v1358
    %1379 = vmatmul.f32.gmra.mxu0 %v1361
    %v1380 = vpop.f32.mrf.mxu0
    %v1381 = vadd.f32 0.0, %v1380
    %1382 = vdwg.mxu0
    %1383 = vrot.lane.b32.xlu0 %v1175, 104
    %v1384 = vpop.permute.xlu0 %1383
    %v1385 = vsel %vm359, %v1384, 0
    %1387 = vmatpush.xpose.msra.mxu0 0.0
    %1388 = vmatpush.xpose.msra.mxu0 0.0
    %1389 = vmatpush.xpose.msra.mxu0 0.0
    %1390 = vmatpush.xpose.msra.mxu0 0.0
    %1391 = vmatpush.xpose.msra.mxu0 0.0
    %1392 = vmatpush.xpose.msra.mxu0 0.0
    %1393 = vmatpush.xpose.msra.mxu0 0.0
    %1394 = vmatpush.xpose.msra.mxu0 0.0
    %1395 = vmatpush.xpose.msra.mxu0 0.0
    %1396 = vmatpush.xpose.msra.mxu0 0.0
    %1397 = vmatpush.xpose.msra.mxu0 0.0
    %1398 = vmatpush.xpose.msra.mxu0 0.0
    %1399 = vmatpush.xpose.msra.mxu0 0.0
    %1400 = vmatpush.xpose.msra.mxu0 0.0
    %1401 = vmatpush.xpose.msra.mxu0 0.0
    %1402 = vmatpush.xpose.msra.mxu0 %v1323
    %1403 = vmatmul.f32.gmra.mxu0 %v1385
    %v1404 = vpop.f32.mrf.mxu0
    %v1405 = vadd.f32 0.0, %v1404
    %1406 = vdwg.mxu0
    %v1407 = vmul.f32 %v1405, 0.35355338
    %v1408 = vsel %vm359, %v1407, -inf
    %1409 = vmax.xlane.f32.xlu0 %v1408
    %v1410 = vpop.xlane.xlu0 %1409
    %v1411 = vsub.f32 %v1407, %v1410
    %v1412 = vmul.f32 %v1411, 1.442695
    %v1413 = vpow.pop %v1412
    %v1414 = vsel %vm359, %v1413, 0.0
    %1415 = vadd.xlane.f32.xlu0 %v1414
    %v1416 = vpop.xlane.xlu0 %1415
    %v1417 = vrcp.pop %v1416
    %v1418 = vmul.f32 %v1413, %v1417
    %v1420 = vsel %vm359, %v1418, 0
    %1422 = vmatpush.msra.mxu0 0.0
    %1423 = vmatpush.msra.mxu0 0.0
    %1424 = vmatpush.msra.mxu0 0.0
    %1425 = vmatpush.msra.mxu0 0.0
    %1426 = vmatpush.msra.mxu0 0.0
    %1427 = vmatpush.msra.mxu0 0.0
    %1428 = vmatpush.msra.mxu0 0.0
    %1429 = vmatpush.msra.mxu0 0.0
    %1430 = vmatpush.msra.mxu0 0.0
    %1431 = vmatpush.msra.mxu0 0.0
    %1432 = vmatpush.msra.mxu0 0.0
    %1433 = vmatpush.msra.mxu0 0.0
    %1434 = vmatpush.msra.mxu0 0.0
    %1435 = vmatpush.msra.mxu0 0.0
    %1436 = vmatpush.msra.mxu0 0.0
    %1437 = vmatpush.msra.mxu0 %v1358
    %1438 = vmatmul.f32.gmra.mxu0 %v1420
    %v1439 = vpop.f32.mrf.mxu0
    %v1440 = vadd.f32 0.0, %v1439
    %1441 = vdwg.mxu0
    %1443 = vrot.lane.b32.xlu0 %v1315, 8
    %v1444 = vpop.permute.xlu0 %1443
    %1447 = vrot.lane.b32.xlu0 %v1381, 16
    %v1448 = vpop.permute.xlu0 %1447
    %1451 = vrot.lane.b32.xlu0 %v1440, 24
    %v1452 = vpop.permute.xlu0 %1451
    %v1454 = vsel %vm359, %v1256, %v1444
    %v1455 = vsel %vm185, %v1454, %v1448
    %v1456 = vsel %vm622, %v1455, %v1452
    %1458 = vrot.lane.b32.xlu0 %v1190, 64
    %v1459 = vpop.permute.xlu0 %1458
    %v1461 = vsel %vm359, %v1176, 0
    %v1463 = vsel %vm359, %v1459, 0
    %1465 = vmatpush.xpose.msra.mxu0 0.0
    %1466 = vmatpush.xpose.msra.mxu0 0.0
    %1467 = vmatpush.xpose.msra.mxu0 0.0
    %1468 = vmatpush.xpose.msra.mxu0 0.0
    %1469 = vmatpush.xpose.msra.mxu0 0.0
    %1470 = vmatpush.xpose.msra.mxu0 0.0
    %1471 = vmatpush.xpose.msra.mxu0 0.0
    %1472 = vmatpush.xpose.msra.mxu0 0.0
    %1473 = vmatpush.xpose.msra.mxu0 0.0
    %1474 = vmatpush.xpose.msra.mxu0 0.0
    %1475 = vmatpush.xpose.msra.mxu0 0.0
    %1476 = vmatpush.xpose.msra.mxu0 0.0
    %1477 = vmatpush.xpose.msra.mxu0 0.0
    %1478 = vmatpush.xpose.msra.mxu0 0.0
    %1479 = vmatpush.xpose.msra.mxu0 0.0
    %1480 = vmatpush.xpose.msra.mxu0 %v1463
    %1481 = vmatmul.f32.gmra.mxu0 %v1461
    %v1482 = vpop.f32.mrf.mxu0
    %v1483 = vadd.f32 0.0, %v1482
    %1484 = vdwg.mxu0
    %v1485 = vmul.f32 %v1483, 0.35355338
    %v1486 = vsel %vm359, %v1485, -inf
    %1487 = vmax.xlane.f32.xlu0 %v1486
    %v1488 = vpop.xlane.xlu0 %1487
    %v1489 = vsub.f32 %v1485, %v1488
    %v1490 = vmul.f32 %v1489, 1.442695
    %v1491 = vpow.pop %v1490
    %v1492 = vsel %vm359, %v1491, 0.0
    %1493 = vadd.xlane.f32.xlu0 %v1492
    %v1494 = vpop.xlane.xlu0 %1493
    %v1495 = vrcp.pop %v1494
    %v1496 = vmul.f32 %v1491, %v1495
    %1498 = vrot.lane.b32.xlu0 %v1161, 32
    %v1499 = vpop.permute.xlu0 %1498
    %v1502 = vsel %vm359, %v1496, 0
    %1504 = vmatpush.msra.mxu0 0.0
    %1505 = vmatpush.msra.mxu0 0.0
    %1506 = vmatpush.msra.mxu0 0.0
    %1507 = vmatpush.msra.mxu0 0.0
    %1508 = vmatpush.msra.mxu0 0.0
    %1509 = vmatpush.msra.mxu0 0.0
    %1510 = vmatpush.msra.mxu0 0.0
    %1511 = vmatpush.msra.mxu0 0.0
    %1512 = vmatpush.msra.mxu0 0.0
    %1513 = vmatpush.msra.mxu0 0.0
    %1514 = vmatpush.msra.mxu0 0.0
    %1515 = vmatpush.msra.mxu0 0.0
    %1516 = vmatpush.msra.mxu0 0.0
    %1517 = vmatpush.msra.mxu0 0.0
    %1518 = vmatpush.msra.mxu0 0.0
    %1519 = vmatpush.msra.mxu0 %v1499
    %1520 = vmatmul.f32.gmra.mxu0 %v1502
    %v1521 = vpop.f32.mrf.mxu0
    %v1522 = vadd.f32 0.0, %v1521
    %1523 = vdwg.mxu0
    %1524 = vrot.lane.b32.xlu0 %v1176, 120
    %v1525 = vpop.permute.xlu0 %1524
    %v1526 = vsel %vm359, %v1525, 0
    %1528 = vmatpush.xpose.msra.mxu0 0.0
    %1529 = vmatpush.xpose.msra.mxu0 0.0
    %1530 = vmatpush.xpose.msra.mxu0 0.0
    %1531 = vmatpush.xpose.msra.mxu0 0.0
    %1532 = vmatpush.xpose.msra.mxu0 0.0
    %1533 = vmatpush.xpose.msra.mxu0 0.0
    %1534 = vmatpush.xpose.msra.mxu0 0.0
    %1535 = vmatpush.xpose.msra.mxu0 0.0
    %1536 = vmatpush.xpose.msra.mxu0 0.0
    %1537 = vmatpush.xpose.msra.mxu0 0.0
    %1538 = vmatpush.xpose.msra.mxu0 0.0
    %1539 = vmatpush.xpose.msra.mxu0 0.0
    %1540 = vmatpush.xpose.msra.mxu0 0.0
    %1541 = vmatpush.xpose.msra.mxu0 0.0
    %1542 = vmatpush.xpose.msra.mxu0 0.0
    %1543 = vmatpush.xpose.msra.mxu0 %v1463
    %1544 = vmatmul.f32.gmra.mxu0 %v1526
    %v1545 = vpop.f32.mrf.mxu0
    %v1546 = vadd.f32 0.0, %v1545
    %1547 = vdwg.mxu0
    %v1548 = vmul.f32 %v1546, 0.35355338
    %v1549 = vsel %vm359, %v1548, -inf
    %1550 = vmax.xlane.f32.xlu0 %v1549
    %v1551 = vpop.xlane.xlu0 %1550
    %v1552 = vsub.f32 %v1548, %v1551
    %v1553 = vmul.f32 %v1552, 1.442695
    %v1554 = vpow.pop %v1553
    %v1555 = vsel %vm359, %v1554, 0.0
    %1556 = vadd.xlane.f32.xlu0 %v1555
    %v1557 = vpop.xlane.xlu0 %1556
    %v1558 = vrcp.pop %v1557
    %v1559 = vmul.f32 %v1554, %v1558
    %v1561 = vsel %vm359, %v1559, 0
    %1563 = vmatpush.msra.mxu0 0.0
    %1564 = vmatpush.msra.mxu0 0.0
    %1565 = vmatpush.msra.mxu0 0.0
    %1566 = vmatpush.msra.mxu0 0.0
    %1567 = vmatpush.msra.mxu0 0.0
    %1568 = vmatpush.msra.mxu0 0.0
    %1569 = vmatpush.msra.mxu0 0.0
    %1570 = vmatpush.msra.mxu0 0.0
    %1571 = vmatpush.msra.mxu0 0.0
    %1572 = vmatpush.msra.mxu0 0.0
    %1573 = vmatpush.msra.mxu0 0.0
    %1574 = vmatpush.msra.mxu0 0.0
    %1575 = vmatpush.msra.mxu0 0.0
    %1576 = vmatpush.msra.mxu0 0.0
    %1577 = vmatpush.msra.mxu0 0.0
    %1578 = vmatpush.msra.mxu0 %v1499
    %1579 = vmatmul.f32.gmra.mxu0 %v1561
    %v1580 = vpop.f32.mrf.mxu0
    %v1581 = vadd.f32 0.0, %v1580
    %1582 = vdwg.mxu0
    %1583 = vrot.lane.b32.xlu0 %v1176, 112
    %v1584 = vpop.permute.xlu0 %1583
    %1585 = vrot.lane.b32.xlu0 %v1190, 56
    %v1586 = vpop.permute.xlu0 %1585
    %v1587 = vsel %vm359, %v1584, 0
    %v1589 = vsel %vm359, %v1586, 0
    %1591 = vmatpush.xpose.msra.mxu0 0.0
    %1592 = vmatpush.xpose.msra.mxu0 0.0
    %1593 = vmatpush.xpose.msra.mxu0 0.0
    %1594 = vmatpush.xpose.msra.mxu0 0.0
    %1595 = vmatpush.xpose.msra.mxu0 0.0
    %1596 = vmatpush.xpose.msra.mxu0 0.0
    %1597 = vmatpush.xpose.msra.mxu0 0.0
    %1598 = vmatpush.xpose.msra.mxu0 0.0
    %1599 = vmatpush.xpose.msra.mxu0 0.0
    %1600 = vmatpush.xpose.msra.mxu0 0.0
    %1601 = vmatpush.xpose.msra.mxu0 0.0
    %1602 = vmatpush.xpose.msra.mxu0 0.0
    %1603 = vmatpush.xpose.msra.mxu0 0.0
    %1604 = vmatpush.xpose.msra.mxu0 0.0
    %1605 = vmatpush.xpose.msra.mxu0 0.0
    %1606 = vmatpush.xpose.msra.mxu0 %v1589
    %1607 = vmatmul.f32.gmra.mxu0 %v1587
    %v1608 = vpop.f32.mrf.mxu0
    %v1609 = vadd.f32 0.0, %v1608
    %1610 = vdwg.mxu0
    %v1611 = vmul.f32 %v1609, 0.35355338
    %v1612 = vsel %vm359, %v1611, -inf
    %1613 = vmax.xlane.f32.xlu0 %v1612
    %v1614 = vpop.xlane.xlu0 %1613
    %v1615 = vsub.f32 %v1611, %v1614
    %v1616 = vmul.f32 %v1615, 1.442695
    %v1617 = vpow.pop %v1616
    %v1618 = vsel %vm359, %v1617, 0.0
    %1619 = vadd.xlane.f32.xlu0 %v1618
    %v1620 = vpop.xlane.xlu0 %1619
    %v1621 = vrcp.pop %v1620
    %v1622 = vmul.f32 %v1617, %v1621
    %1623 = vrot.lane.b32.xlu0 %v1161, 24
    %v1624 = vpop.permute.xlu0 %1623
    %v1627 = vsel %vm359, %v1622, 0
    %1629 = vmatpush.msra.mxu0 0.0
    %1630 = vmatpush.msra.mxu0 0.0
    %1631 = vmatpush.msra.mxu0 0.0
    %1632 = vmatpush.msra.mxu0 0.0
    %1633 = vmatpush.msra.mxu0 0.0
    %1634 = vmatpush.msra.mxu0 0.0
    %1635 = vmatpush.msra.mxu0 0.0
    %1636 = vmatpush.msra.mxu0 0.0
    %1637 = vmatpush.msra.mxu0 0.0
    %1638 = vmatpush.msra.mxu0 0.0
    %1639 = vmatpush.msra.mxu0 0.0
    %1640 = vmatpush.msra.mxu0 0.0
    %1641 = vmatpush.msra.mxu0 0.0
    %1642 = vmatpush.msra.mxu0 0.0
    %1643 = vmatpush.msra.mxu0 0.0
    %1644 = vmatpush.msra.mxu0 %v1624
    %1645 = vmatmul.f32.gmra.mxu0 %v1627
    %v1646 = vpop.f32.mrf.mxu0
    %v1647 = vadd.f32 0.0, %v1646
    %1648 = vdwg.mxu0
    %1649 = vrot.lane.b32.xlu0 %v1176, 104
    %v1650 = vpop.permute.xlu0 %1649
    %v1651 = vsel %vm359, %v1650, 0
    %1653 = vmatpush.xpose.msra.mxu0 0.0
    %1654 = vmatpush.xpose.msra.mxu0 0.0
    %1655 = vmatpush.xpose.msra.mxu0 0.0
    %1656 = vmatpush.xpose.msra.mxu0 0.0
    %1657 = vmatpush.xpose.msra.mxu0 0.0
    %1658 = vmatpush.xpose.msra.mxu0 0.0
    %1659 = vmatpush.xpose.msra.mxu0 0.0
    %1660 = vmatpush.xpose.msra.mxu0 0.0
    %1661 = vmatpush.xpose.msra.mxu0 0.0
    %1662 = vmatpush.xpose.msra.mxu0 0.0
    %1663 = vmatpush.xpose.msra.mxu0 0.0
    %1664 = vmatpush.xpose.msra.mxu0 0.0
    %1665 = vmatpush.xpose.msra.mxu0 0.0
    %1666 = vmatpush.xpose.msra.mxu0 0.0
    %1667 = vmatpush.xpose.msra.mxu0 0.0
    %1668 = vmatpush.xpose.msra.mxu0 %v1589
    %1669 = vmatmul.f32.gmra.mxu0 %v1651
    %v1670 = vpop.f32.mrf.mxu0
    %v1671 = vadd.f32 0.0, %v1670
    %1672 = vdwg.mxu0
    %v1673 = vmul.f32 %v1671, 0.35355338
    %v1674 = vsel %vm359, %v1673, -inf
    %1675 = vmax.xlane.f32.xlu0 %v1674
    %v1676 = vpop.xlane.xlu0 %1675
    %v1677 = vsub.f32 %v1673, %v1676
    %v1678 = vmul.f32 %v1677, 1.442695
    %v1679 = vpow.pop %v1678
    %v1680 = vsel %vm359, %v1679, 0.0
    %1681 = vadd.xlane.f32.xlu0 %v1680
    %v1682 = vpop.xlane.xlu0 %1681
    %v1683 = vrcp.pop %v1682
    %v1684 = vmul.f32 %v1679, %v1683
    %v1686 = vsel %vm359, %v1684, 0
    %1688 = vmatpush.msra.mxu0 0.0
    %1689 = vmatpush.msra.mxu0 0.0
    %1690 = vmatpush.msra.mxu0 0.0
    %1691 = vmatpush.msra.mxu0 0.0
    %1692 = vmatpush.msra.mxu0 0.0
    %1693 = vmatpush.msra.mxu0 0.0
    %1694 = vmatpush.msra.mxu0 0.0
    %1695 = vmatpush.msra.mxu0 0.0
    %1696 = vmatpush.msra.mxu0 0.0
    %1697 = vmatpush.msra.mxu0 0.0
    %1698 = vmatpush.msra.mxu0 0.0
    %1699 = vmatpush.msra.mxu0 0.0
    %1700 = vmatpush.msra.mxu0 0.0
    %1701 = vmatpush.msra.mxu0 0.0
    %1702 = vmatpush.msra.mxu0 0.0
    %1703 = vmatpush.msra.mxu0 %v1624
    %1704 = vmatmul.f32.gmra.mxu0 %v1686
    %v1705 = vpop.f32.mrf.mxu0
    %v1706 = vadd.f32 0.0, %v1705
    %1707 = vdwg.mxu0
    %1709 = vrot.lane.b32.xlu0 %v1581, 8
    %v1710 = vpop.permute.xlu0 %1709
    %1713 = vrot.lane.b32.xlu0 %v1647, 16
    %v1714 = vpop.permute.xlu0 %1713
    %1717 = vrot.lane.b32.xlu0 %v1706, 24
    %v1718 = vpop.permute.xlu0 %1717
    %v1720 = vsel %vm359, %v1522, %v1710
    %v1721 = vsel %vm185, %v1720, %v1714
    %v1722 = vsel %vm622, %v1721, %v1718
    %s1723 = scalar_lea.vmem %s9, 32
    %v1724 = vld [vmem:[%s1723] sm:$0xff]
    %v1725 = vld [vmem:[%s1723 + $0x8] sm:$0xff]
    %v1726 = vld [vmem:[%s1723 + $0x10] sm:$0xff]
    %v1727 = vld [vmem:[%s1723 + $0x18] sm:$0xff]
    %v1729 = vsel %vm226, %v1456, 0
    %v1732 = vsel %vm226, %v1722, 0
    %1734 = vmatpush.msra.mxu0 0.0
    %1735 = vmatpush.msra.mxu0 0.0
    %1736 = vmatpush.msra.mxu0 0.0
    %1737 = vmatpush.msra.mxu0 0.0
    %1738 = vmatpush.msra.mxu0 0.0
    %1739 = vmatpush.msra.mxu0 0.0
    %1740 = vmatpush.msra.mxu0 0.0
    %1741 = vmatpush.msra.mxu0 0.0
    %1742 = vmatpush.msra.mxu0 0.0
    %1743 = vmatpush.msra.mxu0 0.0
    %1744 = vmatpush.msra.mxu0 0.0
    %1745 = vmatpush.msra.mxu0 0.0
    %1746 = vmatpush.msra.mxu0 %v1727
    %1747 = vmatpush.msra.mxu0 %v1726
    %1748 = vmatpush.msra.mxu0 %v1725
    %1749 = vmatpush.msra.mxu0 %v1724
    %1750 = vmatmul.f32.gmra.mxu0 %v1729
    %v1751 = vpop.f32.mrf.mxu0
    %v1752 = vadd.f32 0.0, %v1751
    %1753 = vmatmul.f32.gmra.mxu0 %v1732
    %v1754 = vpop.f32.mrf.mxu0
    %v1755 = vadd.f32 0.0, %v1754
    %1756 = vdwg.mxu0
    %v1757 = vadd.f32 %v1086, %v1752
    %v1758 = vadd.f32 %v1087, %v1755
    %s1759 = scalar_lea.vmem %s10, 1
    %v1760 = vld [vmem:[%s1759] sm:$0x1]
    %v1761 = vmul.f32 %v1757, %v1757
    %v1762 = vmul.f32 %v1758, %v1758
    %v1763 = vsel %vm226, %v1761, 0.0
    %1764 = vadd.xlane.f32.xlu0 %v1763
    %v1765 = vpop.xlane.xlu0 %1764
    %v1766 = vsel %vm226, %v1762, 0.0
    %1767 = vadd.xlane.f32.xlu0 %v1766
    %v1768 = vpop.xlane.xlu0 %1767
    %v1769 = vmul.f32 %v1765, %v239
    %v1770 = vmul.f32 %v1768, %v239
    %v1771 = vadd.f32 %v1769, 1e-05
    %v1772 = vadd.f32 %v1770, 1e-05
    %v1773 = vrsqrt.pop %v1771
    %v1774 = vmul.f32 %v1773, %v1771
    %v1775 = vmul.f32 %v1774, %v1773
    %v1776 = vmul.f32 0.5, %v1775
    %v1777 = vsub.f32 1.5, %v1776
    %v1778 = vmul.f32 %v1773, %v1777
    %vm1779 = vweird.f32 %v1771
    %vm1780 = vweird.f32 %v1773
    %vm1781 = vmor %vm1779, %vm1780
    %v1782 = vsel %vm1781, %v1773, %v1778
    %v1783 = vrsqrt.pop %v1772
    %v1784 = vmul.f32 %v1783, %v1772
    %v1785 = vmul.f32 %v1784, %v1783
    %v1786 = vmul.f32 0.5, %v1785
    %v1787 = vsub.f32 1.5, %v1786
    %v1788 = vmul.f32 %v1783, %v1787
    %vm1789 = vweird.f32 %v1772
    %vm1790 = vweird.f32 %v1783
    %vm1791 = vmor %vm1789, %vm1790
    %v1792 = vsel %vm1791, %v1783, %v1788
    %v1793 = vmul.f32 %v1757, %v1782
    %v1794 = vmul.f32 %v1758, %v1792
    %v1796 = vperm.slane %v1760, 0
    %v1798 = vmul.f32 %v1793, %v1796
    %v1799 = vmul.f32 %v1794, %v1796
    %s1800 = scalar_lea.vmem %s11, 32
    %v1801 = vld [vmem:[%s1800] sm:$0xff]
    %v1802 = vld [vmem:[%s1800 + $0x8] sm:$0xff]
    %v1803 = vld [vmem:[%s1800 + $0x10] sm:$0xff]
    %v1804 = vld [vmem:[%s1800 + $0x18] sm:$0xff]
    %v1806 = vsel %vm226, %v1798, 0
    %v1809 = vsel %vm226, %v1799, 0
    %1811 = vmatpush.msra.mxu0 0.0
    %1812 = vmatpush.msra.mxu0 0.0
    %1813 = vmatpush.msra.mxu0 0.0
    %1814 = vmatpush.msra.mxu0 0.0
    %1815 = vmatpush.msra.mxu0 0.0
    %1816 = vmatpush.msra.mxu0 0.0
    %1817 = vmatpush.msra.mxu0 0.0
    %1818 = vmatpush.msra.mxu0 0.0
    %1819 = vmatpush.msra.mxu0 0.0
    %1820 = vmatpush.msra.mxu0 0.0
    %1821 = vmatpush.msra.mxu0 0.0
    %1822 = vmatpush.msra.mxu0 0.0
    %1823 = vmatpush.msra.mxu0 %v1804
    %1824 = vmatpush.msra.mxu0 %v1803
    %1825 = vmatpush.msra.mxu0 %v1802
    %1826 = vmatpush.msra.mxu0 %v1801
    %1827 = vmatmul.f32.gmra.mxu0 %v1806
    %v1828 = vpop.f32.mrf.mxu0
    %v1829 = vadd.f32 0.0, %v1828
    %1830 = vmatmul.f32.gmra.mxu0 %v1809
    %v1831 = vpop.f32.mrf.mxu0
    %v1832 = vadd.f32 0.0, %v1831
    %1833 = vdwg.mxu0
    %v1834 = vxor.u32 %v1829, 2147483648
    %v1835 = vxor.u32 %v1832, 2147483648
    %v1836 = vmul.f32 %v1834, 1.442695
    %v1837 = vpow.pop %v1836
    %v1838 = vmul.f32 %v1835, 1.442695
    %v1839 = vpow.pop %v1838
    %v1840 = vadd.f32 %v1837, 1.0
    %v1841 = vadd.f32 %v1839, 1.0
    %v1842 = vrcp.pop %v1840
    %v1843 = vmul.f32 %v1840, %v1842
    %v1844 = vsub.f32 1.0, %v1843
    %v1845 = vmul.f32 %v1842, %v1844
    %v1846 = vadd.f32 %v1842, %v1845
    %vm1847 = vweird.f32 %v1840
    %vm1848 = vweird.f32 %v1842
    %vm1849 = vmor %vm1847, %vm1848
    %v1850 = vsel %vm1849, %v1842, %v1846
    %v1851 = vand.u32 2147483647, %v1840
    %vm1852 = vcmp.eq.f32.partialorder %v1851, 8.507059e+37
    %v1853 = vand.u32 %v1840, 2147483648
    %v1854 = vor.u32 1.1754944e-38, %v1853
    %v1855 = vsel %vm1852, %v1854, %v1850
    %v1856 = vmul.f32 1.0, %v1855
    %v1857 = vrcp.pop %v1841
    %v1858 = vmul.f32 %v1841, %v1857
    %v1859 = vsub.f32 1.0, %v1858
    %v1860 = vmul.f32 %v1857, %v1859
    %v1861 = vadd.f32 %v1857, %v1860
    %vm1862 = vweird.f32 %v1841
    %vm1863 = vweird.f32 %v1857
    %vm1864 = vmor %vm1862, %vm1863
    %v1865 = vsel %vm1864, %v1857, %v1861
    %v1866 = vand.u32 2147483647, %v1841
    %vm1867 = vcmp.eq.f32.partialorder %v1866, 8.507059e+37
    %v1868 = vand.u32 %v1841, 2147483648
    %v1869 = vor.u32 1.1754944e-38, %v1868
    %v1870 = vsel %vm1867, %v1869, %v1865
    %v1871 = vmul.f32 1.0, %v1870
    %v1872 = vmul.f32 %v1829, %v1856
    %v1873 = vmul.f32 %v1832, %v1871
    %1876 = vrot.lane.b32.xlu0 %v1829, 64
    %v1877 = vpop.permute.xlu0 %1876
    %1878 = vrot.lane.b32.xlu0 %v1832, 64
    %v1879 = vpop.permute.xlu0 %1878
    %v1882 = vmul.f32 %v1872, %v1877
    %v1883 = vmul.f32 %v1873, %v1879
    %s1884 = scalar_lea.vmem %s12, 64
    %v1885 = vld [vmem:[%s1884] sm:$0xff]
    %v1886 = vld [vmem:[%s1884 + $0x8] sm:$0xff]
    %v1887 = vld [vmem:[%s1884 + $0x10] sm:$0xff]
    %v1888 = vld [vmem:[%s1884 + $0x18] sm:$0xff]
    %v1889 = vld [vmem:[%s1884 + $0x20] sm:$0xff]
    %v1890 = vld [vmem:[%s1884 + $0x28] sm:$0xff]
    %v1891 = vld [vmem:[%s1884 + $0x30] sm:$0xff]
    %v1892 = vld [vmem:[%s1884 + $0x38] sm:$0xff]
    %v1894 = vsel %vm1056, %v1882, 0
    %v1897 = vsel %vm1056, %v1883, 0
    %1899 = vmatpush.msra.mxu0 0.0
    %1900 = vmatpush.msra.mxu0 0.0
    %1901 = vmatpush.msra.mxu0 0.0
    %1902 = vmatpush.msra.mxu0 0.0
    %1903 = vmatpush.msra.mxu0 0.0
    %1904 = vmatpush.msra.mxu0 0.0
    %1905 = vmatpush.msra.mxu0 0.0
    %1906 = vmatpush.msra.mxu0 0.0
    %1907 = vmatpush.msra.mxu0 %v1892
    %1908 = vmatpush.msra.mxu0 %v1891
    %1909 = vmatpush.msra.mxu0 %v1890
    %1910 = vmatpush.msra.mxu0 %v1889
    %1911 = vmatpush.msra.mxu0 %v1888
    %1912 = vmatpush.msra.mxu0 %v1887
    %1913 = vmatpush.msra.mxu0 %v1886
    %1914 = vmatpush.msra.mxu0 %v1885
    %1915 = vmatmul.f32.gmra.mxu0 %v1894
    %v1916 = vpop.f32.mrf.mxu0
    %v1917 = vadd.f32 0.0, %v1916
    %1918 = vmatmul.f32.gmra.mxu0 %v1897
    %v1919 = vpop.f32.mrf.mxu0
    %v1920 = vadd.f32 0.0, %v1919
    %1921 = vdwg.mxu0
    %v1922 = vadd.f32 %v1757, %v1917
    %v1923 = vadd.f32 %v1758, %v1920
    %v1924 = vld [vmem:[%s13] sm:$0x1]
    %v1925 = vmul.f32 %v1922, %v1922
    %v1926 = vmul.f32 %v1923, %v1923
    %v1927 = vsel %vm226, %v1925, 0.0
    %1928 = vadd.xlane.f32.xlu0 %v1927
    %v1929 = vpop.xlane.xlu0 %1928
    %v1930 = vsel %vm226, %v1926, 0.0
    %1931 = vadd.xlane.f32.xlu0 %v1930
    %v1932 = vpop.xlane.xlu0 %1931
    %v1933 = vmul.f32 %v1929, %v239
    %v1934 = vmul.f32 %v1932, %v239
    %v1935 = vadd.f32 %v1933, 1e-05
    %v1936 = vadd.f32 %v1934, 1e-05
    %v1937 = vrsqrt.pop %v1935
    %v1938 = vmul.f32 %v1937, %v1935
    %v1939 = vmul.f32 %v1938, %v1937
    %v1940 = vmul.f32 0.5, %v1939
    %v1941 = vsub.f32 1.5, %v1940
    %v1942 = vmul.f32 %v1937, %v1941
    %vm1943 = vweird.f32 %v1935
    %vm1944 = vweird.f32 %v1937
    %vm1945 = vmor %vm1943, %vm1944
    %v1946 = vsel %vm1945, %v1937, %v1942
    %v1947 = vrsqrt.pop %v1936
    %v1948 = vmul.f32 %v1947, %v1936
    %v1949 = vmul.f32 %v1948, %v1947
    %v1950 = vmul.f32 0.5, %v1949
    %v1951 = vsub.f32 1.5, %v1950
    %v1952 = vmul.f32 %v1947, %v1951
    %vm1953 = vweird.f32 %v1936
    %vm1954 = vweird.f32 %v1947
    %vm1955 = vmor %vm1953, %vm1954
    %v1956 = vsel %vm1955, %v1947, %v1952
    %v1957 = vmul.f32 %v1922, %v1946
    %v1958 = vmul.f32 %v1923, %v1956
    %v1960 = vperm.slane %v1924, 0
    %v1962 = vmul.f32 %v1957, %v1960
    %v1963 = vmul.f32 %v1958, %v1960
    %v1964 = vsel %vm226, %v1962, 0.0
    %v1965 = vrot.slane %v1964, 4
    %v1966 = vadd.f32 %v1964, %v1965
    %v1967 = vrot.slane %v1966, 2
    %v1968 = vadd.f32 %v1966, %v1967
    %v1969 = vrot.slane %v1968, 1
    %v1970 = vadd.f32 %v1968, %v1969
    %v1971 = vrcp.pop 8.0
    %v1972 = vmul.f32 8.0, %v1971
    %v1973 = vsub.f32 1.0, %v1972
    %v1974 = vmul.f32 %v1971, %v1973
    %v1975 = vadd.f32 %v1971, %v1974
    %vm1976 = vweird.f32 %v1971
    %v1977 = vsel %vm1976, %v1971, %v1975
    %v1978 = vmul.f32 %v1970, %v1977
    %v1979 = vsel %vm226, %v1963, 0.0
    %v1980 = vrot.slane %v1979, 4
    %v1981 = vadd.f32 %v1979, %v1980
    %v1982 = vrot.slane %v1981, 2
    %v1983 = vadd.f32 %v1981, %v1982
    %v1984 = vrot.slane %v1983, 1
    %v1985 = vadd.f32 %v1983, %v1984
    %v1986 = vmul.f32 %v1985, %v1977
    %vm1987 = vcmask 1040384
    %v1988 = vsel %vm1987, %v1978, %v1986
    %v1989 = vld [vmem:[#allocation14] sm:$0xff]
    %v1990 = vld [vmem:[#allocation14 + $0x8] sm:$0xff]
    %v1991 = vld [vmem:[#allocation14 + $0x10] sm:$0xff]
    %v1992 = vld [vmem:[#allocation14 + $0x18] sm:$0xff]
    %v1993 = vld [vmem:[%s15] sm:$0x1]
    %v1995 = vperm.slane %v1993, 0
    %v1998 = vsel %vm226, %v1988, 0
    %2000 = vmatpush.msra.mxu0 0.0
    %2001 = vmatpush.msra.mxu0 0.0
    %2002 = vmatpush.msra.mxu0 0.0
    %2003 = vmatpush.msra.mxu0 0.0
    %2004 = vmatpush.msra.mxu0 0.0
    %2005 = vmatpush.msra.mxu0 0.0
    %2006 = vmatpush.msra.mxu0 0.0
    %2007 = vmatpush.msra.mxu0 0.0
    %2008 = vmatpush.msra.mxu0 0.0
    %2009 = vmatpush.msra.mxu0 0.0
    %2010 = vmatpush.msra.mxu0 0.0
    %2011 = vmatpush.msra.mxu0 0.0
    %2012 = vmatpush.msra.mxu0 %v1992
    %2013 = vmatpush.msra.mxu0 %v1991
    %2014 = vmatpush.msra.mxu0 %v1990
    %2015 = vmatpush.msra.mxu0 %v1989
    %2016 = vmatmul.f32.gmra.mxu0 %v1998
    %v2017 = vpop.f32.mrf.mxu0
    %v2018 = vadd.f32 %v1995, %v2017
    %2019 = vdwg.mxu0
    %2020 = vst [vmem:[#allocation16] sm:$0x3] %v2018
    // Predicated region
    $region98: #{tpu_custom_call.1} parent=1 // pred_check
      _
    $region99: #{tpu_custom_call.1} parent=1 // pred_check_branch
      %2022 = sbr.rel (0) target = $region101
    $region100: #{tpu_custom_call.1} parent=1 // pred_region
      %2024 = vsyncadd [#allocation4], 0
      %s2026 = sshll.u32 [#allocation16], 4
      %s2027 = int_to_ptr.vmem [resolvable:$true] %s2026
      %s2028 = sshll.u32 %s16, 4
      %s2029 = int_to_ptr.hbm [resolvable:$true] %s2028
      %2031 = dma.vmem_to_hbm [thread:$0]  %s2027, 32, %s2029, [#allocation4]
    $region101: #{tpu_custom_call.1} parent=1 // pred_fallthru
      _
    // Predicated region
    $region102: #{tpu_custom_call.1} parent=1 // pred_check
      _
    $region103: #{tpu_custom_call.1} parent=1 // pred_check_branch
      %2033 = sbr.rel (0) target = $region105
    $region104: #{tpu_custom_call.1} parent=1 // pred_region
      %2035 = dma.done [#allocation4], 32
    $region105: #{tpu_custom_call.1} parent=1 // pred_fallthru
      _
    %2036 = vsyncpa [#allocation3], 1
    %2037 = vsyncpa [#allocation6], 1
    %2038 = vsyncpa [#allocation9], 1
    %2039 = vsyncpa [#allocation12], 1
    %2040 = vsyncpa [#allocation15], 1
    %2041 = vsyncpa [#allocation4], 1

</llo_original>
